<compile_context>
chip_gen: v5e
topology: v5e:2x2
jax: 0.10.0
libtpu: 0.0.40
codegen_flags: <defaults>
</compile_context>

<pallas_src>
import functools

import jax
import jax.numpy as jnp
from jax import lax
from jax.experimental import pallas as pl
from jax.experimental.pallas import tpu as pltpu


def _round_up(x, m):
    return ((x + m - 1) // m) * m


def _tpu_config():
    """Per-generation knobs: (core_split, vmem_limit_bytes)."""
    try:
        kind = jax.devices()[0].device_kind.lower()
    except Exception:  # pragma: no cover - defensive
        kind = ""
    is_v7 = ("v7" in kind) or ("tpu7" in kind)
    core_split = 2 if is_v7 else 1                  # 2 TCs only on v7x
    vmem_limit = (48 << 20) if is_v7 else (64 << 20)  # leave headroom vs 64/128 MiB
    return core_split, vmem_limit


def _stats_kernel(n_valid, z_ref, g_ref, shift_ref, sumg_ref, sumgz_ref, m2_ref):
    """Fused sweep: soft counts, weighted sums, uncentered (shifted) 2nd moment.

    z_ref: (D, TN) lane-dense sample block, g_ref: (K, TN), shift_ref: (D, 1).
    sumg_ref: (1, K, 1), sumgz_ref: (1, K, D), m2_ref: (1, D, K*D) with
    m2[0, d, k*D+d'] = sum_n g[k,n] (z-shift)[d,n] (z-shift)[d',n].
    Accumulators are resident per core (grid axis 0) across axis 1.
    """
    @pl.when(pl.program_id(1) == 0)
    def _():
        sumg_ref[...] = jnp.zeros_like(sumg_ref)
        sumgz_ref[...] = jnp.zeros_like(sumgz_ref)
        m2_ref[...] = jnp.zeros_like(m2_ref)

    d, tn = z_ref.shape
    k_gmm = g_ref.shape[0]

    # Tail / duplicate-block mask. NOTE: must stay in sync with the column
    # index_map: logical block index == program_id(0)*num_programs(1)+program_id(1).
    blk = pl.program_id(0) * pl.num_programs(1) + pl.program_id(1)
    lane = lax.broadcasted_iota(jnp.int32, (1, tn), 1)
    valid = (blk * tn + lane) < n_valid
    # zero BOTH z and g before any arithmetic so garbage columns can't make NaN
    z = jnp.where(valid, z_ref[...], 0.0) - shift_ref[...]   # (D, TN), shifted
    g = jnp.where(valid, g_ref[...], 0.0)                    # (K, TN)

    # soft counts: lane (sample) reduction
    sumg = jnp.sum(g, axis=1, keepdims=True)                 # (K, 1)

    # contract over the sample (lane) axis on the MXU ("NT" matmuls)
    dn = (((1,), (1,)), ((), ()))
    sumgz = lax.dot_general(g, z, dn,
                            preferred_element_type=jnp.float32)   # (K, D)

    # all-K second moment in a single matmul; gz built with one broadcasted
    # multiply + layout-preserving reshape (no in-kernel concatenate copies)
    gz = (g[:, None, :] * z[None, :, :]).reshape(k_gmm * d, tn)   # (K*D, TN)
    m2 = lax.dot_general(z, gz, dn,
                         preferred_element_type=jnp.float32)      # (D, K*D)

    sumg_ref[...] = sumg_ref[...] + sumg[None]
    sumgz_ref[...] = sumgz_ref[...] + sumgz[None]
    m2_ref[...] = m2_ref[...] + m2[None]


def _energy_kernel(eps, n_valid, z_ref, a_ref, coef_ref, c_ref, esum_ref):
    """Per-sample GMM energy with the quadratic form expanded:
       quad_k(z) = z^T Cinv_k z - 2 (Cinv_k mu_k)^T z + mu_k^T Cinv_k mu_k
    a_ref rows [0, K*D) hold stacked Cinv_k, rows [K*D, K*D+K) hold Cinv_k mu_k
    (zero-padded to a multiple of 8 rows). coef_ref/c_ref are (K, 1).
    """
    @pl.when(pl.program_id(1) == 0)
    def _():
        esum_ref[...] = jnp.zeros_like(esum_ref)

    d, tn = z_ref.shape
    k_gmm = coef_ref.shape[0]
    kd = k_gmm * d

    # same logical-block-index convention as the stats kernel / index_map
    blk = pl.program_id(0) * pl.num_programs(1) + pl.program_id(1)
    lane = lax.broadcasted_iota(jnp.int32, (1, tn), 1)
    valid = (blk * tn + lane) < n_valid
    z = jnp.where(valid, z_ref[...], 0.0)                    # (D, TN)

    # one MXU matmul covers all components' Cinv z and (Cinv mu)^T z
    v = jnp.dot(a_ref[...], z, preferred_element_type=jnp.float32)   # (rows, TN)

    # grouped sublane reduction instead of K concatenated slices
    q1 = jnp.sum(v[:kd].reshape(k_gmm, d, tn) * z[None, :, :], axis=1)  # (K, TN)
    vb = v[kd:kd + k_gmm, :]                                            # (K, TN)
    quad = q1 - 2.0 * vb + c_ref[...]                                   # (K, TN)

    # TODO(synk): no log-sum-exp stabilization, mirroring the PyTorch reference.
    w = jnp.sum(coef_ref[...] * jnp.exp(-0.5 * quad),
                axis=0, keepdims=True)                                  # (1, TN)

    e = jnp.where(valid, -jnp.log(w + eps), 0.0)
    esum_ref[...] = esum_ref[...] + jnp.sum(e, axis=1, keepdims=True)[None]


def gmm_loss(z, gamma, *, lambda_energy, lambda_cov, eps=1e-9,
             tile_n=None, core_split=None):
    B, S1, S2, D = z.shape
    K = gamma.shape[-1]
    N = B * S1 * S2

    auto_split, vmem_limit = _tpu_config()
    if core_split is None:
        core_split = auto_split

    # ---- lane-dense layout: big sample axis on the 128-lane minor dim ----
    # TODO(synk): ideally the upstream producer emits (D, N)/(K, N) directly;
    # here the transpose is one XLA copy (fused with reshape/astype under jit).
    zt = z.reshape(N, D).T.astype(jnp.float32)       # (D, N)
    gt = gamma.reshape(N, K).T.astype(jnp.float32)   # (K, N)
    # cheap per-feature shift (prefix mean) -> second moment accumulated around
    # it, avoiding catastrophic cancellation in cov = M2/sum_g - mu mu^T
    shift = jnp.mean(zt[:, :min(N, 4096)], axis=1, keepdims=True)  # (D, 1)

    # ---- tile sizing: amortize grid-step overhead, respect VMEM budget ----
    # live bytes/sample: double-buffered z+g blocks, masked copies, the
    # (K*D, TN) gz / (K*D+K, TN) v intermediates, plus slack.
    bytes_per_sample = 2 * (D + K) * 4 + (K * D) * 4 + (K * D + K + D) * 4 + 64
    cap_budget = max(128, ((vmem_limit - (8 << 20)) // bytes_per_sample) // 128 * 128)
    n_per_core = pl.cdiv(N, core_split)
    if tile_n is None:
        tile_n = _round_up(pl.cdiv(n_per_core, 4), 128)   # aim for >=4 blocks/core
        tile_n = max(8192, min(tile_n, 32768))
    tile_n = max(128, _round_up(tile_n, 128))
    tile_n = min(tile_n, cap_budget, _round_up(n_per_core, 128))

    blocks = pl.cdiv(N, tile_n)                      # total column blocks
    per_core = pl.cdiv(blocks, core_split)
    grid = (core_split, per_core)

    cparams = pltpu.CompilerParams(
        dimension_semantics=("parallel", "arbitrary"),
        vmem_limit_bytes=vmem_limit)

    def col(c, i):
        # Logical column block c*per_core + i (the kernels' masks assume exactly
        # this). Clamp so a trailing empty block just re-reads the last valid
        # block; its contribution is zeroed by the in-kernel mask.
        return (0, jnp.minimum(c * per_core + i, blocks - 1))

    acc3 = lambda c, i: (c, 0, 0)
    const = lambda c, i: (0, 0)

    # ---- pass 1: fused soft-count / weighted-sum / second-moment sweep ----
    sumg_p, sumgz_p, m2_p = pl.pallas_call(
        functools.partial(_stats_kernel, N),
        out_shape=(jax.ShapeDtypeStruct((core_split, K, 1), jnp.float32),
                   jax.ShapeDtypeStruct((core_split, K, D), jnp.float32),
                   jax.ShapeDtypeStruct((core_split, D, K * D), jnp.float32)),
        grid_spec=pltpu.PrefetchScalarGridSpec(
            num_scalar_prefetch=0,
            grid=grid,
            in_specs=[pl.BlockSpec((D, tile_n), col),
                      pl.BlockSpec((K, tile_n), col),
                      pl.BlockSpec((D, 1), const)],
            out_specs=(pl.BlockSpec((1, K, 1), acc3),
                       pl.BlockSpec((1, K, D), acc3),
                       pl.BlockSpec((1, D, K * D), acc3))),
        compiler_params=cparams,
    )(zt, gt, shift)

    sum_g = jnp.sum(sumg_p, axis=0)[:, 0]            # (K,)
    sum_gz = jnp.sum(sumgz_p, axis=0)                # (K, D)  shifted first moment
    m2 = jnp.sum(m2_p, axis=0)                       # (D, K*D) shifted second moment

    phi = sum_g / N                                  # (K,)
    mu_c = sum_gz / sum_g[:, None]                   # (K, D)  mean of (z - shift)
    mu = mu_c + shift[:, 0][None, :]                 # (K, D)  true mean
    m2k = m2.reshape(D, K, D).transpose(1, 0, 2) / sum_g[:, None, None]
    cov = m2k - mu_c[:, :, None] * mu_c[:, None, :]  # (K, D, D) centered covariance

    # ---- tiny per-component linear algebra: plain JAX glue ----
    # TODO(synk): batched DxD matrix inverse/determinant have no Pallas primitive.
    cov_k = cov + eps * jnp.eye(D, dtype=jnp.float32)
    cov_inv = jnp.linalg.inv(cov_k)                  # (K, D, D)
    det_cov = jnp.linalg.det(cov_k) + eps            # (K,)
    cov_diag = jnp.sum(1.0 / (jnp.diagonal(cov_k, axis1=-2, axis2=-1) + eps))
    coef = (phi / jnp.sqrt(det_cov)).reshape(K, 1)   # (K, 1)

    # expanded quadratic-form precompute for the energy kernel
    b = jnp.einsum('kij,kj->ki', cov_inv, mu)        # (K, D) = Cinv_k mu_k
    c_const = jnp.sum(b * mu, axis=1).reshape(K, 1)  # (K, 1) = mu^T Cinv mu
    a_rows = _round_up(K * D + K, 8)
    a_full = jnp.zeros((a_rows, D), jnp.float32)
    a_full = a_full.at[:K * D].set(cov_inv.reshape(K * D, D))
    a_full = a_full.at[K * D:K * D + K].set(b)

    # ---- pass 2: per-sample GMM energy reduced to per-core partial sums ----
    esum_p = pl.pallas_call(
        functools.partial(_energy_kernel, eps, N),
        out_shape=jax.ShapeDtypeStruct((core_split, 1, 1), jnp.float32),
        grid_spec=pltpu.PrefetchScalarGridSpec(
            num_scalar_prefetch=0,
            grid=grid,
            in_specs=[pl.BlockSpec((D, tile_n), col),
                      pl.BlockSpec((a_rows, D), const),
                      pl.BlockSpec((K, 1), const),
                      pl.BlockSpec((K, 1), const)],
            out_specs=pl.BlockSpec((1, 1, 1), acc3)),
        compiler_params=cparams,
    )(zt, a_full, coef, c_const)

    sample_energy = jnp.sum(esum_p) / N
    return lambda_energy * sample_energy + lambda_cov * cov_diag


def gmm_loss_ref(z, gamma, *, lambda_energy, lambda_cov, eps=1e-9):
    """Pure-JAX reference mirroring the PyTorch module semantics."""
    N = z.shape[0] * z.shape[1] * z.shape[2]
    sum_g = jnp.sum(gamma, axis=(0, 1, 2))                        # [K]
    phi = sum_g / N
    mu = jnp.sum(z[..., None, :] * gamma[..., None], axis=(0, 1, 2)) / sum_g[:, None]
    z_mu = z[..., None, :] - mu                                   # [B,S1,S2,K,D]
    cov = jnp.sum(gamma[..., None, None] * (z_mu[..., :, None] * z_mu[..., None, :]),
                  axis=(0, 1, 2)) / sum_g[:, None, None]
    D = z.shape[-1]
    cov_k = cov + eps * jnp.eye(D, dtype=jnp.float32)
    cov_inv = jnp.linalg.inv(cov_k)
    det_cov = jnp.linalg.det(cov_k) + eps
    cov_diag = jnp.sum(1.0 / (jnp.diagonal(cov_k, axis1=-2, axis2=-1) + eps))
    quad = jnp.einsum('...ki,kij,...kj->...k', z_mu, cov_inv, z_mu)
    E = jnp.exp(-0.5 * quad)
    Ez = -jnp.log(jnp.sum(phi * E / jnp.sqrt(det_cov), axis=-1) + eps)
    return lambda_energy * jnp.mean(Ez) + lambda_cov * cov_diag


if __name__ == "__main__":
    key = jax.random.PRNGKey(0)
    lambda_energy, lambda_cov, eps = 0.1, 0.005, 1e-9

    # ---- test 1: small shapes consistent with the module ----
    B, S1, S2, D, K = 2, 4, 8, 8, 4          # n_gmm = 4, N = 64 samples
    kz, kg, key = jax.random.split(key, 3)
    z = jax.random.normal(kz, (B, S1, S2, D), dtype=jnp.float32)
    gamma = jax.nn.softmax(
        jax.random.normal(kg, (B, S1, S2, K), dtype=jnp.float32), axis=-1)

    loss_fn = jax.jit(functools.partial(
        gmm_loss, lambda_energy=lambda_energy, lambda_cov=lambda_cov, eps=eps))
    loss = jax.block_until_ready(loss_fn(z, gamma))
    loss_ref = gmm_loss_ref(z, gamma, lambda_energy=lambda_energy,
                            lambda_cov=lambda_cov, eps=eps)
    assert bool(jnp.isfinite(loss)), loss
    assert bool(jnp.allclose(loss, loss_ref, rtol=1e-3, atol=1e-3)), (loss, loss_ref)

    # ---- test 2: multi-block grid, partial tail block and clamped duplicate
    # block on the 2-way core split (exercises the in-kernel masking path) ----
    B2, S1b, S2b = 2, 40, 81                 # N = 6480 -> 13 blocks of 512
    kz2, kg2, key = jax.random.split(key, 3)
    z2 = 0.5 * jax.random.normal(kz2, (B2, S1b, S2b, D), dtype=jnp.float32) + 1.0
    gamma2 = jax.nn.softmax(
        jax.random.normal(kg2, (B2, S1b, S2b, K), dtype=jnp.float32), axis=-1)

    loss_fn2 = jax.jit(functools.partial(
        gmm_loss, lambda_energy=lambda_energy, lambda_cov=lambda_cov, eps=eps,
        tile_n=512, core_split=2))
    loss2 = jax.block_until_ready(loss_fn2(z2, gamma2))
    loss2_ref = gmm_loss_ref(z2, gamma2, lambda_energy=lambda_energy,
                             lambda_cov=lambda_cov, eps=eps)
    assert bool(jnp.isfinite(loss2)), loss2
    assert bool(jnp.allclose(loss2, loss2_ref, rtol=1e-3, atol=1e-3)), (loss2, loss2_ref)

    print("KERNEL_OK")
</pallas_src>

<mosaic_0001>
module attributes {stable_mosaic.version = 11 : i64} {
  func.func @_stats_kernel(%arg0: i32, %arg1: i32, %arg2: memref<8x128xf32, #tpu.memory_space<vmem>>, %arg3: memref<4x128xf32, #tpu.memory_space<vmem>>, %arg4: memref<8x1xf32, #tpu.memory_space<vmem>>, %arg5: memref<1x4x1xf32, #tpu.memory_space<vmem>>, %arg6: memref<1x4x8xf32, #tpu.memory_space<vmem>>, %arg7: memref<1x8x32xf32, #tpu.memory_space<vmem>>) attributes {dimension_semantics = [#tpu.dimension_semantics<parallel>, #tpu.dimension_semantics<arbitrary>], iteration_bounds = array<i64: 1, 1>, scalar_prefetch = 0 : i64, scratch_operands = 0 : i64, tpu.core_type = #tpu.core_type<tc>, window_params = [{transform_indices = @transform_0, window_bounds = array<i64: 8, 128>}, {transform_indices = @transform_1, window_bounds = array<i64: 4, 128>}, {pipeline_mode = #tpu.pipeline_mode<synchronous>, transform_indices = @transform_2, window_bounds = array<i64: 8, 1>}, {transform_indices = @transform_3, window_bounds = array<i64: 1, 4, 1>}, {transform_indices = @transform_4, window_bounds = array<i64: 1, 4, 8>}, {transform_indices = @transform_5, window_bounds = array<i64: 1, 8, 32>}]} {
    %c0_i32 = arith.constant 0 : i32
    %0 = arith.cmpi eq, %arg1, %c0_i32 : i32
    %1 = arith.extui %0 : i1 to i32
    %c0_i32_0 = arith.constant 0 : i32
    %2 = arith.cmpi ne, %1, %c0_i32_0 : i32
    scf.if %2 {
      %cst_28 = arith.constant 0.000000e+00 : f32
      %46 = vector.broadcast %cst_28 : f32 to vector<1x4x1xf32>
      %c0_29 = arith.constant 0 : index
      %c0_30 = arith.constant 0 : index
      %c0_31 = arith.constant 0 : index
      %47 = vector.load %arg5[%c0_29, %c0_30, %c0_31] : memref<1x4x1xf32, #tpu.memory_space<vmem>>, vector<1x4x1xf32>
      tpu.vector_store %arg5[%c0_29, %c0_30, %c0_31], %46 {strides = array<i32>} : memref<1x4x1xf32, #tpu.memory_space<vmem>>, vector<1x4x1xf32>,
      %cst_32 = arith.constant 0.000000e+00 : f32
      %48 = vector.broadcast %cst_32 : f32 to vector<1x4x8xf32>
      %c0_33 = arith.constant 0 : index
      %c0_34 = arith.constant 0 : index
      %c0_35 = arith.constant 0 : index
      %49 = vector.load %arg6[%c0_33, %c0_34, %c0_35] : memref<1x4x8xf32, #tpu.memory_space<vmem>>, vector<1x4x8xf32>
      tpu.vector_store %arg6[%c0_33, %c0_34, %c0_35], %48 {strides = array<i32>} : memref<1x4x8xf32, #tpu.memory_space<vmem>>, vector<1x4x8xf32>,
      %cst_36 = arith.constant 0.000000e+00 : f32
      %50 = vector.broadcast %cst_36 : f32 to vector<1x8x32xf32>
      %c0_37 = arith.constant 0 : index
      %c0_38 = arith.constant 0 : index
      %c0_39 = arith.constant 0 : index
      %51 = vector.load %arg7[%c0_37, %c0_38, %c0_39] : memref<1x8x32xf32, #tpu.memory_space<vmem>>, vector<1x8x32xf32>
      tpu.vector_store %arg7[%c0_37, %c0_38, %c0_39], %50 {strides = array<i32>} : memref<1x8x32xf32, #tpu.memory_space<vmem>>, vector<1x8x32xf32>,
    } else {
    }
    %c1_i32 = arith.constant 1 : i32
    %3 = arith.muli %arg0, %c1_i32 : i32
    %4 = arith.addi %3, %arg1 : i32
    %5 = tpu.iota {dimensions = array<i32: 1>} : vector<1x128xi32>
    %c128_i32 = arith.constant 128 : i32
    %6 = arith.muli %4, %c128_i32 : i32
    %7 = vector.broadcast %6 : i32 to vector<1x128xi32>
    %8 = arith.addi %7, %5 : vector<1x128xi32>
    %c64_i32 = arith.constant 64 : i32
    %9 = vector.broadcast %c64_i32 : i32 to vector<1x128xi32>
    %10 = arith.cmpi slt, %8, %9 : vector<1x128xi32>
    %c0 = arith.constant 0 : index
    %c0_1 = arith.constant 0 : index
    %11 = vector.load %arg2[%c0, %c0_1] : memref<8x128xf32, #tpu.memory_space<vmem>>, vector<8x128xf32>
    %cst = arith.constant 0.000000e+00 : f32
    %12 = vector.shape_cast %10 : vector<1x128xi1> to vector<1x128xi1>
    %13 = vector.broadcast %12 : vector<1x128xi1> to vector<8x128xi1>
    %14 = vector.broadcast %cst : f32 to vector<8x128xf32>
    %15 = arith.select %13, %11, %14 : vector<8x128xi1>, vector<8x128xf32>
    %c0_2 = arith.constant 0 : index
    %c0_3 = arith.constant 0 : index
    %16 = vector.load %arg4[%c0_2, %c0_3] : memref<8x1xf32, #tpu.memory_space<vmem>>, vector<8x1xf32>
    %17 = vector.broadcast %16 : vector<8x1xf32> to vector<8x128xf32>
    %18 = arith.subf %15, %17 : vector<8x128xf32>
    %c0_4 = arith.constant 0 : index
    %c0_5 = arith.constant 0 : index
    %19 = vector.load %arg3[%c0_4, %c0_5] : memref<4x128xf32, #tpu.memory_space<vmem>>, vector<4x128xf32>
    %cst_6 = arith.constant 0.000000e+00 : f32
    %20 = vector.shape_cast %10 : vector<1x128xi1> to vector<1x128xi1>
    %21 = vector.broadcast %20 : vector<1x128xi1> to vector<4x128xi1>
    %22 = vector.broadcast %cst_6 : f32 to vector<4x128xf32>
    %23 = arith.select %21, %19, %22 : vector<4x128xi1>, vector<4x128xf32>
    %cst_7 = arith.constant dense<0.000000e+00> : vector<4xf32>
    %24 = vector.multi_reduction <add>, %23, %cst_7 [1] : vector<4x128xf32> to vector<4xf32>
    %25 = vector.shape_cast %24 : vector<4xf32> to vector<4x1xf32>
    %cst_8 = arith.constant dense<0.000000e+00> : vector<4x8xf32>
    %26 = tpu.matmul %23, %18, %cst_8 {dimension_numbers = #tpu.dot_dimension_numbers<[1], [1], [0], [0], [0, 0, 1, 0], [], []>} : vector<4x128xf32>, vector<8x128xf32>, vector<4x8xf32> -> vector<4x8xf32>
    %27 = vector.shape_cast %23 : vector<4x128xf32> to vector<4x1x128xf32>
    %28 = vector.shape_cast %18 : vector<8x128xf32> to vector<1x8x128xf32>
    %29 = vector.broadcast %27 : vector<4x1x128xf32> to vector<4x8x128xf32>
    %30 = vector.broadcast %28 : vector<1x8x128xf32> to vector<4x8x128xf32>
    %31 = arith.mulf %29, %30 : vector<4x8x128xf32>
    %32 = vector.shape_cast %31 : vector<4x8x128xf32> to vector<32x128xf32>
    %cst_9 = arith.constant dense<0.000000e+00> : vector<8x32xf32>
    %33 = tpu.matmul %18, %32, %cst_9 {dimension_numbers = #tpu.dot_dimension_numbers<[1], [1], [0], [0], [0, 0, 1, 0], [], []>} : vector<8x128xf32>, vector<32x128xf32>, vector<8x32xf32> -> vector<8x32xf32>
    %c0_10 = arith.constant 0 : index
    %c0_11 = arith.constant 0 : index
    %c0_12 = arith.constant 0 : index
    %34 = vector.load %arg5[%c0_10, %c0_11, %c0_12] : memref<1x4x1xf32, #tpu.memory_space<vmem>>, vector<1x4x1xf32>
    %35 = vector.shape_cast %25 : vector<4x1xf32> to vector<1x4x1xf32>
    %36 = arith.addf %34, %35 : vector<1x4x1xf32>
    %c0_13 = arith.constant 0 : index
    %c0_14 = arith.constant 0 : index
    %c0_15 = arith.constant 0 : index
    %37 = vector.load %arg5[%c0_13, %c0_14, %c0_15] : memref<1x4x1xf32, #tpu.memory_space<vmem>>, vector<1x4x1xf32>
    tpu.vector_store %arg5[%c0_13, %c0_14, %c0_15], %36 {strides = array<i32>} : memref<1x4x1xf32, #tpu.memory_space<vmem>>, vector<1x4x1xf32>,
    %c0_16 = arith.constant 0 : index
    %c0_17 = arith.constant 0 : index
    %c0_18 = arith.constant 0 : index
    %38 = vector.load %arg6[%c0_16, %c0_17, %c0_18] : memref<1x4x8xf32, #tpu.memory_space<vmem>>, vector<1x4x8xf32>
    %39 = vector.shape_cast %26 : vector<4x8xf32> to vector<1x4x8xf32>
    %40 = arith.addf %38, %39 : vector<1x4x8xf32>
    %c0_19 = arith.constant 0 : index
    %c0_20 = arith.constant 0 : index
    %c0_21 = arith.constant 0 : index
    %41 = vector.load %arg6[%c0_19, %c0_20, %c0_21] : memref<1x4x8xf32, #tpu.memory_space<vmem>>, vector<1x4x8xf32>
    tpu.vector_store %arg6[%c0_19, %c0_20, %c0_21], %40 {strides = array<i32>} : memref<1x4x8xf32, #tpu.memory_space<vmem>>, vector<1x4x8xf32>,
    %c0_22 = arith.constant 0 : index
    %c0_23 = arith.constant 0 : index
    %c0_24 = arith.constant 0 : index
    %42 = vector.load %arg7[%c0_22, %c0_23, %c0_24] : memref<1x8x32xf32, #tpu.memory_space<vmem>>, vector<1x8x32xf32>
    %43 = vector.shape_cast %33 : vector<8x32xf32> to vector<1x8x32xf32>
    %44 = arith.addf %42, %43 : vector<1x8x32xf32>
    %c0_25 = arith.constant 0 : index
    %c0_26 = arith.constant 0 : index
    %c0_27 = arith.constant 0 : index
    %45 = vector.load %arg7[%c0_25, %c0_26, %c0_27] : memref<1x8x32xf32, #tpu.memory_space<vmem>>, vector<1x8x32xf32>
    tpu.vector_store %arg7[%c0_25, %c0_26, %c0_27], %44 {strides = array<i32>} : memref<1x8x32xf32, #tpu.memory_space<vmem>>, vector<1x8x32xf32>,
    return
  }
  func.func @transform_0(%arg0: i32, %arg1: i32) -> (i32, i32) {
    %c1_i32 = arith.constant 1 : i32
    %0 = arith.muli %arg0, %c1_i32 : i32
    %1 = arith.addi %0, %arg1 : i32
    %c0_i32 = arith.constant 0 : i32
    %2 = arith.minsi %1, %c0_i32 : i32
    %c0_i32_0 = arith.constant 0 : i32
    %c0_i32_1 = arith.constant 0 : i32
    return %c0_i32_0, %2 : i32, i32
  }
  func.func @transform_1(%arg0: i32, %arg1: i32) -> (i32, i32) {
    %c1_i32 = arith.constant 1 : i32
    %0 = arith.muli %arg0, %c1_i32 : i32
    %1 = arith.addi %0, %arg1 : i32
    %c0_i32 = arith.constant 0 : i32
    %2 = arith.minsi %1, %c0_i32 : i32
    %c0_i32_0 = arith.constant 0 : i32
    %c0_i32_1 = arith.constant 0 : i32
    return %c0_i32_0, %2 : i32, i32
  }
  func.func @transform_2(%arg0: i32, %arg1: i32) -> (i32, i32) {
    %c0_i32 = arith.constant 0 : i32
    %c0_i32_0 = arith.constant 0 : i32
    %c0_i32_1 = arith.constant 0 : i32
    return %c0_i32, %c0_i32_0 : i32, i32
  }
  func.func @transform_3(%arg0: i32, %arg1: i32) -> (i32, i32, i32) {
    %c0_i32 = arith.constant 0 : i32
    %c0_i32_0 = arith.constant 0 : i32
    %c0_i32_1 = arith.constant 0 : i32
    return %arg0, %c0_i32, %c0_i32_0 : i32, i32, i32
  }
  func.func @transform_4(%arg0: i32, %arg1: i32) -> (i32, i32, i32) {
    %c0_i32 = arith.constant 0 : i32
    %c0_i32_0 = arith.constant 0 : i32
    %c0_i32_1 = arith.constant 0 : i32
    return %arg0, %c0_i32, %c0_i32_0 : i32, i32, i32
  }
  func.func @transform_5(%arg0: i32, %arg1: i32) -> (i32, i32, i32) {
    %c0_i32 = arith.constant 0 : i32
    %c0_i32_0 = arith.constant 0 : i32
    %c0_i32_1 = arith.constant 0 : i32
    return %arg0, %c0_i32, %c0_i32_0 : i32, i32, i32
  }
}

module attributes {stable_mosaic.version = 11 : i64} {
  func.func @_energy_kernel(%arg0: i32, %arg1: i32, %arg2: memref<8x128xf32, #tpu.memory_space<vmem>>, %arg3: memref<40x8xf32, #tpu.memory_space<vmem>>, %arg4: memref<4x1xf32, #tpu.memory_space<vmem>>, %arg5: memref<4x1xf32, #tpu.memory_space<vmem>>, %arg6: memref<1x1x1xf32, #tpu.memory_space<vmem>>) attributes {dimension_semantics = [#tpu.dimension_semantics<parallel>, #tpu.dimension_semantics<arbitrary>], iteration_bounds = array<i64: 1, 1>, scalar_prefetch = 0 : i64, scratch_operands = 0 : i64, tpu.core_type = #tpu.core_type<tc>, window_params = [{transform_indices = @transform_0, window_bounds = array<i64: 8, 128>}, {pipeline_mode = #tpu.pipeline_mode<synchronous>, transform_indices = @transform_1, window_bounds = array<i64: 40, 8>}, {pipeline_mode = #tpu.pipeline_mode<synchronous>, transform_indices = @transform_2, window_bounds = array<i64: 4, 1>}, {pipeline_mode = #tpu.pipeline_mode<synchronous>, transform_indices = @transform_3, window_bounds = array<i64: 4, 1>}, {transform_indices = @transform_4, window_bounds = array<i64: 1, 1, 1>}]} {
    %c0_i32 = arith.constant 0 : i32
    %0 = arith.cmpi eq, %arg1, %c0_i32 : i32
    %1 = arith.extui %0 : i1 to i32
    %c0_i32_0 = arith.constant 0 : i32
    %2 = arith.cmpi ne, %1, %c0_i32_0 : i32
    scf.if %2 {
      %cst_23 = arith.constant 0.000000e+00 : f32
      %52 = vector.broadcast %cst_23 : f32 to vector<1x1x1xf32>
      %c0_24 = arith.constant 0 : index
      %c0_25 = arith.constant 0 : index
      %c0_26 = arith.constant 0 : index
      %53 = vector.load %arg6[%c0_24, %c0_25, %c0_26] : memref<1x1x1xf32, #tpu.memory_space<vmem>>, vector<1x1x1xf32>
      tpu.vector_store %arg6[%c0_24, %c0_25, %c0_26], %52 {strides = array<i32>} : memref<1x1x1xf32, #tpu.memory_space<vmem>>, vector<1x1x1xf32>,
    } else {
    }
    %c1_i32 = arith.constant 1 : i32
    %3 = arith.muli %arg0, %c1_i32 : i32
    %4 = arith.addi %3, %arg1 : i32
    %5 = tpu.iota {dimensions = array<i32: 1>} : vector<1x128xi32>
    %c128_i32 = arith.constant 128 : i32
    %6 = arith.muli %4, %c128_i32 : i32
    %7 = vector.broadcast %6 : i32 to vector<1x128xi32>
    %8 = arith.addi %7, %5 : vector<1x128xi32>
    %c64_i32 = arith.constant 64 : i32
    %9 = vector.broadcast %c64_i32 : i32 to vector<1x128xi32>
    %10 = arith.cmpi slt, %8, %9 : vector<1x128xi32>
    %c0 = arith.constant 0 : index
    %c0_1 = arith.constant 0 : index
    %11 = vector.load %arg2[%c0, %c0_1] : memref<8x128xf32, #tpu.memory_space<vmem>>, vector<8x128xf32>
    %cst = arith.constant 0.000000e+00 : f32
    %12 = vector.shape_cast %10 : vector<1x128xi1> to vector<1x128xi1>
    %13 = vector.broadcast %12 : vector<1x128xi1> to vector<8x128xi1>
    %14 = vector.broadcast %cst : f32 to vector<8x128xf32>
    %15 = arith.select %13, %11, %14 : vector<8x128xi1>, vector<8x128xf32>
    %c0_2 = arith.constant 0 : index
    %c0_3 = arith.constant 0 : index
    %16 = vector.load %arg3[%c0_2, %c0_3] : memref<40x8xf32, #tpu.memory_space<vmem>>, vector<40x8xf32>
    %cst_4 = arith.constant dense<0.000000e+00> : vector<40x128xf32>
    %17 = tpu.matmul %16, %15, %cst_4 {dimension_numbers = #tpu.dot_dimension_numbers<[1], [0], [0], [1], [0, 0, 1, 1], [], []>} : vector<40x8xf32>, vector<8x128xf32>, vector<40x128xf32> -> vector<40x128xf32>
    %18 = vector.extract_strided_slice %17 {offsets = [0, 0], sizes = [32, 128], strides = [1, 1]} : vector<40x128xf32> to vector<32x128xf32>
    %19 = vector.shape_cast %18 : vector<32x128xf32> to vector<4x8x128xf32>
    %20 = vector.shape_cast %15 : vector<8x128xf32> to vector<1x8x128xf32>
    %21 = vector.broadcast %20 : vector<1x8x128xf32> to vector<4x8x128xf32>
    %22 = arith.mulf %19, %21 : vector<4x8x128xf32>
    %cst_5 = arith.constant dense<0.000000e+00> : vector<4x128xf32>
    %23 = vector.multi_reduction <add>, %22, %cst_5 [1] : vector<4x8x128xf32> to vector<4x128xf32>
    %24 = vector.extract_strided_slice %17 {offsets = [32, 0], sizes = [4, 128], strides = [1, 1]} : vector<40x128xf32> to vector<4x128xf32>
    %cst_6 = arith.constant 2.000000e+00 : f32
    %25 = vector.broadcast %cst_6 : f32 to vector<4x128xf32>
    %26 = arith.mulf %25, %24 : vector<4x128xf32>
    %27 = arith.subf %23, %26 : vector<4x128xf32>
    %c0_7 = arith.constant 0 : index
    %c0_8 = arith.constant 0 : index
    %28 = vector.load %arg5[%c0_7, %c0_8] : memref<4x1xf32, #tpu.memory_space<vmem>>, vector<4x1xf32>
    %29 = vector.broadcast %28 : vector<4x1xf32> to vector<4x128xf32>
    %30 = arith.addf %27, %29 : vector<4x128xf32>
    %c0_9 = arith.constant 0 : index
    %c0_10 = arith.constant 0 : index
    %31 = vector.load %arg4[%c0_9, %c0_10] : memref<4x1xf32, #tpu.memory_space<vmem>>, vector<4x1xf32>
    %cst_11 = arith.constant -5.000000e-01 : f32
    %32 = vector.broadcast %cst_11 : f32 to vector<4x128xf32>
    %33 = arith.mulf %32, %30 : vector<4x128xf32>
    %34 = math.exp %33 : vector<4x128xf32>
    %35 = vector.broadcast %31 : vector<4x1xf32> to vector<4x128xf32>
    %36 = arith.mulf %35, %34 : vector<4x128xf32>
    %cst_12 = arith.constant dense<0.000000e+00> : vector<128xf32>
    %37 = vector.multi_reduction <add>, %36, %cst_12 [0] : vector<4x128xf32> to vector<128xf32>
    %38 = vector.shape_cast %37 : vector<128xf32> to vector<1x128xf32>
    %cst_13 = arith.constant 9.99999971E-10 : f32
    %39 = vector.broadcast %cst_13 : f32 to vector<1x128xf32>
    %40 = arith.addf %38, %39 : vector<1x128xf32>
    %41 = math.log %40 : vector<1x128xf32>
    %cst_14 = arith.constant 0.000000e+00 : f32
    %42 = vector.broadcast %cst_14 : f32 to vector<1x128xf32>
    %43 = arith.subf %42, %41 : vector<1x128xf32>
    %cst_15 = arith.constant 0.000000e+00 : f32
    %44 = vector.broadcast %cst_15 : f32 to vector<1x128xf32>
    %45 = arith.select %10, %43, %44 : vector<1x128xi1>, vector<1x128xf32>
    %c0_16 = arith.constant 0 : index
    %c0_17 = arith.constant 0 : index
    %c0_18 = arith.constant 0 : index
    %46 = vector.load %arg6[%c0_16, %c0_17, %c0_18] : memref<1x1x1xf32, #tpu.memory_space<vmem>>, vector<1x1x1xf32>
    %cst_19 = arith.constant dense<0.000000e+00> : vector<1xf32>
    %47 = vector.multi_reduction <add>, %45, %cst_19 [1] : vector<1x128xf32> to vector<1xf32>
    %48 = vector.shape_cast %47 : vector<1xf32> to vector<1x1xf32>
    %49 = vector.shape_cast %48 : vector<1x1xf32> to vector<1x1x1xf32>
    %50 = arith.addf %46, %49 : vector<1x1x1xf32>
    %c0_20 = arith.constant 0 : index
    %c0_21 = arith.constant 0 : index
    %c0_22 = arith.constant 0 : index
    %51 = vector.load %arg6[%c0_20, %c0_21, %c0_22] : memref<1x1x1xf32, #tpu.memory_space<vmem>>, vector<1x1x1xf32>
    tpu.vector_store %arg6[%c0_20, %c0_21, %c0_22], %50 {strides = array<i32>} : memref<1x1x1xf32, #tpu.memory_space<vmem>>, vector<1x1x1xf32>,
    return
  }
  func.func @transform_0(%arg0: i32, %arg1: i32) -> (i32, i32) {
    %c1_i32 = arith.constant 1 : i32
    %0 = arith.muli %arg0, %c1_i32 : i32
    %1 = arith.addi %0, %arg1 : i32
    %c0_i32 = arith.constant 0 : i32
    %2 = arith.minsi %1, %c0_i32 : i32
    %c0_i32_0 = arith.constant 0 : i32
    %c0_i32_1 = arith.constant 0 : i32
    return %c0_i32_0, %2 : i32, i32
  }
  func.func @transform_1(%arg0: i32, %arg1: i32) -> (i32, i32) {
    %c0_i32 = arith.constant 0 : i32
    %c0_i32_0 = arith.constant 0 : i32
    %c0_i32_1 = arith.constant 0 : i32
    return %c0_i32, %c0_i32_0 : i32, i32
  }
  func.func @transform_2(%arg0: i32, %arg1: i32) -> (i32, i32) {
    %c0_i32 = arith.constant 0 : i32
    %c0_i32_0 = arith.constant 0 : i32
    %c0_i32_1 = arith.constant 0 : i32
    return %c0_i32, %c0_i32_0 : i32, i32
  }
  func.func @transform_3(%arg0: i32, %arg1: i32) -> (i32, i32) {
    %c0_i32 = arith.constant 0 : i32
    %c0_i32_0 = arith.constant 0 : i32
    %c0_i32_1 = arith.constant 0 : i32
    return %c0_i32, %c0_i32_0 : i32, i32
  }
  func.func @transform_4(%arg0: i32, %arg1: i32) -> (i32, i32, i32) {
    %c0_i32 = arith.constant 0 : i32
    %c0_i32_0 = arith.constant 0 : i32
    %c0_i32_1 = arith.constant 0 : i32
    return %arg0, %c0_i32, %c0_i32_0 : i32, i32, i32
  }
}

</mosaic_0001>

<llo_original>
// kernel: custom-call.19
$region0: #{custom-call.19}
  %s0 = inlined_call_operand.vmem [shape: f32[4,8,8], index: 0, kind: input, shape index: {}]
  %s1 = inlined_call_operand.vmem [shape: f32[4,8,8], index: 1, kind: output, shape index: {0}]
  %s2 = inlined_call_operand.vmem [shape: s32[4,8], index: 2, kind: output, shape index: {1}]
  %s3 = inlined_call_operand.vmem [shape: s32[4,8], index: 3, kind: output, shape index: {2}]
  %4 = xla_tuple %s1, %s2, %s3
  $region1: #{custom-call.19} parent=0
    #allocation0 [shape = 'u8[8192]{0}', space=vmem, size = 0x2000, scoped, tag = 'operand span for operand 0']
    #allocation1 [shape = 'u8[8192]{0}', space=vmem, size = 0x2000, scoped, tag = 'operand span for operand 1']
    #allocation2 [shape = 'u8[4096]{0}', space=vmem, size = 0x1000, scoped, tag = 'operand span for operand 2']
    #allocation3 [shape = 'u8[4096]{0}', space=vmem, size = 0x1000, scoped, tag = 'packed  for operand 2']
    #allocation4 [shape = 'u8[4096]{0}', space=vmem, size = 0x1000, scoped, tag = 'operand span for operand 3']
    #allocation5 [shape = 'u8[4096]{0}', space=vmem, size = 0x1000, scoped, tag = 'packed  for operand 3']
    loop: start=0, step=1, limit=6
    $region2: #{custom-call.19} parent=1 // loop_pre_header
      _
    $region3: #{custom-call.19} parent=1 // loop_header
      %s6 = sphi 0, %s10
      %p7 = scmp.ge.s32.totalorder %s6, 6
      %s18 = sphi 0, %s20
      %s21 = sphi 0, %s18
      %s22 = sphi 0, %s21
      %s38 = sphi 0, %s22
      %s46 = sphi 0, %s48
      %s49 = sphi 0, %s46
      %s50 = sphi 0, %s49
      %s66 = sphi 0, %s50
    $region4: #{custom-call.19} parent=1 // loop_header_branch
      %9 = sbr.rel (%p7) target = $region8
    $region5: #{custom-call.19} parent=1 // loop_body
      %s11 = ssub.s32 %s6, 1
      %s12 = ssub.s32 %s6, 2
      %s13 = sadd.s32 %s6, 1
      %s14 = sshrl.u32 %s6, 3
      %s15 = sshrl.u32 %s13, 3
      %s16 = ssub.s32 %s14, %s15
      %p17 = scmp.eq.s32.totalorder %s16, 0
      %s19 = sadd.s32 %s18, 1
      %s20 = scalar_select %p17, %s18, %s19
      %p23 = pneg %p17
      %p24 = scmp.eq.s32.totalorder %s6, 3
      %p25 = por %p23, %p24
      %p26 = scmp.ne.s32.totalorder %s18, %s21
      %p27 = scmp.eq.s32.totalorder %s6, 0
      %p28 = por %p26, %p27
      %p29 = scmp.ne.s32.totalorder %s18, %s21
      %p30 = scmp.eq.s32.totalorder %s11, 3
      %p31 = por %p29, %p30
      %p32 = scmp.ne.s32.totalorder %s21, %s22
      %p33 = scmp.eq.s32.totalorder %s11, 0
      %p34 = por %p32, %p33
      %p35 = scmp.ne.s32.totalorder %s21, %s22
      %p36 = scmp.eq.s32.totalorder %s12, 3
      %p37 = por %p35, %p36
      %p39 = scmp.ne.s32.totalorder %s22, %s38
      %p40 = scmp.eq.s32.totalorder %s12, 0
      %p41 = por %p39, %p40
      %s42 = sshrl.u32 %s6, 3
      %s43 = sshrl.u32 %s13, 3
      %s44 = ssub.s32 %s42, %s43
      %p45 = scmp.eq.s32.totalorder %s44, 0
      %s47 = sadd.s32 %s46, 1
      %s48 = scalar_select %p45, %s46, %s47
      %p51 = pneg %p45
      %p52 = scmp.eq.s32.totalorder %s6, 3
      %p53 = por %p51, %p52
      %p54 = scmp.ne.s32.totalorder %s46, %s49
      %p55 = scmp.eq.s32.totalorder %s6, 0
      %p56 = por %p54, %p55
      %p57 = scmp.ne.s32.totalorder %s46, %s49
      %p58 = scmp.eq.s32.totalorder %s11, 3
      %p59 = por %p57, %p58
      %p60 = scmp.ne.s32.totalorder %s49, %s50
      %p61 = scmp.eq.s32.totalorder %s11, 0
      %p62 = por %p60, %p61
      %p63 = scmp.ne.s32.totalorder %s49, %s50
      %p64 = scmp.eq.s32.totalorder %s12, 3
      %p65 = por %p63, %p64
      %p67 = scmp.ne.s32.totalorder %s50, %s66
      %p68 = scmp.eq.s32.totalorder %s12, 0
      %p69 = por %p67, %p68
      %p70 = scmp.le.s32.totalorder 1, %s6
      %p71 = scmp.lt.s32.totalorder %s6, 5
      %p72 = pnand %p70, %p71
      %p73 = pneg %p72
      // Predicated region
      $region9: #{custom-call.19} parent=5 // pred_check
        _
      $region10: #{custom-call.19} parent=5 // pred_check_branch
        %75 = sbr.rel (%p72) target = $region12
      $region11: #{custom-call.19} parent=5 // pred_region
        %s76 = ssub.s32 %s6, 1
      $region12: #{custom-call.19} parent=5 // pred_fallthru
        _
      %p77 = scmp.lt.s32.totalorder %s6, 4
      // Predicated region
      $region13: #{custom-call.19} parent=5 // pred_check
        %p78 = pneg %p77
      $region14: #{custom-call.19} parent=5 // pred_check_branch
        %80 = sbr.rel (%p78) target = $region16
      $region15: #{custom-call.19} parent=5 // pred_region
        %s81 = sand.u32 %s6, 1
        %s82 = sand.u32 %s6, 1
        %s83 = smul.addr %s82, 8
        %s84 = scalar_lea.vmem [#allocation0], %s83
        %s85 = smul.addr %s6, 8
        %s86 = scalar_lea.vmem %s0, %s85
        // Predicated region
        $region17: #{custom-call.19} parent=15 // pred_check
          _
        $region18: #{custom-call.19} parent=15 // pred_check_branch
          %88 = sbr.rel (0) target = $region20
        $region19: #{custom-call.19} parent=15 // pred_region
          // Predicated region
          $region21: #{custom-call.19} parent=19 // pred_check
            _
          $region22: #{custom-call.19} parent=19 // pred_check_branch
            %90 = sbr.rel (0) target = $region24
          $region23: #{custom-call.19} parent=19 // pred_region
            // Predicated region
            $region36: #{custom-call.19} parent=23 // pred_check
              _
            $region37: #{custom-call.19} parent=23 // pred_check_branch
              %106 = sbr.rel (0) target = $region39
            $region38: #{custom-call.19} parent=23 // pred_region
              loop: start=0, step=1, limit=1
              $region40: #{custom-call.19} parent=38 // loop_pre_header
                _
              $region41: #{custom-call.19} parent=38 // loop_header
                %s108 = sphi 0, %s112
                %p109 = scmp.ge.s32.totalorder %s108, 1
                %s113 = sphi %s86, %s86
                %s114 = sphi %s84, %s84
              $region42: #{custom-call.19} parent=38 // loop_header_branch
                %111 = sbr.rel (%p109) target = $region46
              $region43: #{custom-call.19} parent=38 // loop_body
                %v115 = vld [vmem:[%s113] sm:$0xff]
                %116 = vst [vmem:[%s114] sm:$0xff] %v115
              $region44: #{custom-call.19} parent=38 // loop_footer
                %s112 = sadd.s32 1, %s108
              $region45: #{custom-call.19} parent=38 // loop_footer_branch
                %107 = sbr.rel target = $region41
              $region46: #{custom-call.19} parent=38 // loop_exit
                _
            $region39: #{custom-call.19} parent=23 // pred_fallthru
              _
            // Predicated region
            $region47: #{custom-call.19} parent=23 // pred_check
              _
            $region48: #{custom-call.19} parent=23 // pred_check_branch
              %118 = sbr.rel target = $region50
            $region49: #{custom-call.19} parent=23 // pred_region
              _
            $region50: #{custom-call.19} parent=23 // pred_fallthru
              _
          $region24: #{custom-call.19} parent=19 // pred_fallthru
            _
          // Predicated region
          $region25: #{custom-call.19} parent=19 // pred_check
            _
          $region26: #{custom-call.19} parent=19 // pred_check_branch
            %92 = sbr.rel target = $region28
          $region27: #{custom-call.19} parent=19 // pred_region
            %s94 = ssub.s32 256, 1
            loop: start=0, step=1, limit=1
            $region29: #{custom-call.19} parent=27 // loop_pre_header
              _
            $region30: #{custom-call.19} parent=27 // loop_header
              %s96 = sphi 0, %s100
              %p97 = scmp.ge.s32.totalorder %s96, 1
              %s101 = sphi %s86, %s86
              %s102 = sphi %s84, %s84
            $region31: #{custom-call.19} parent=27 // loop_header_branch
              %99 = sbr.rel (%p97) target = $region35
            $region32: #{custom-call.19} parent=27 // loop_body
              %v103 = vld [vmem:[%s101] sm:%s94]
              %104 = vst [vmem:[%s102] sm:%s94] %v103
            $region33: #{custom-call.19} parent=27 // loop_footer
              %s100 = sadd.s32 1, %s96
            $region34: #{custom-call.19} parent=27 // loop_footer_branch
              %95 = sbr.rel target = $region30
            $region35: #{custom-call.19} parent=27 // loop_exit
              _
          $region28: #{custom-call.19} parent=19 // pred_fallthru
            _
        $region20: #{custom-call.19} parent=15 // pred_fallthru
          _
        %119 = vnop
      $region16: #{custom-call.19} parent=5 // pred_fallthru
        _
      %p120 = scmp.le.s32.totalorder 1, %s6
      %p121 = scmp.lt.s32.totalorder %s6, 5
      %p122 = pnand %p120, %p121
      %p123 = pneg %p122
      // Predicated region
      $region51: #{custom-call.19} parent=5 // pred_check
        _
      $region52: #{custom-call.19} parent=5 // pred_check_branch
        %125 = sbr.rel (%p122) target = $region54
      $region53: #{custom-call.19} parent=5 // pred_region
        #allocation6 [shape = 's32[8,128]{1,0}', space=vmem, size = 0x1000, scoped, tag = 'scratch for permutations']
        %s126 = ssub.s32 %s6, 1
        %s127 = sand.u32 %s11, 1
        %s128 = sand.u32 %s11, 1
        %s129 = smul.addr %s128, 8
        %s130 = scalar_lea.vmem [#allocation0], %s129
        %s131 = sand.u32 %s11, 1
        %s132 = sand.u32 %s11, 1
        %s133 = smul.addr %s132, 8
        %s134 = scalar_lea.vmem [#allocation0], %s133
        %s135 = sand.u32 %s11, 1
        %s136 = sand.u32 %s11, 1
        %s137 = smul.addr %s136, 8
        %s138 = scalar_lea.vmem [#allocation1], %s137
        %p139 = pneg %p34
        %p140 = pneg %p31
        %s141 = sand.u32 %s21, 1
        %s142 = sand.u32 %s21, 1
        %s143 = smul.addr %s142, 4
        %s144 = scalar_lea.vmem [#allocation3], %s143
        %p145 = pneg %p62
        %p146 = pneg %p59
        %s147 = sand.u32 %s49, 1
        %s148 = sand.u32 %s49, 1
        %s149 = smul.addr %s148, 4
        %s150 = scalar_lea.vmem [#allocation5], %s149
        %s151 = sshrl.u32 %s11, 3
        %s152 = sshrl.u32 %s11, 3
        %v153 = vld [vmem:[%s130] sm:$0xff]
        %154 = vst [vmem:[%s138] sm:$0xff] %v153
        %s155 = sand.u32 %s11, 7
        %s156 = scalar_lea.vmem [#allocation2], %s155
        %s157 = sand.u32 %s11, 7
        %s158 = scalar_lea.vmem [#allocation4], %s157
        %159 = vst [vmem:[%s156] sm:$0x1] 0
        %v160 = vlaneseq
        %v161 = vshrl.u32 %v160, 7
        %v162 = vmov %v161
        %164 = vst [vmem:[#allocation6] sm:$0xff] %v162
        loop: start=0, step=1, limit=8
        $region56: #{custom-call.19} parent=53 // loop_pre_header
          _
        $region57: #{custom-call.19} parent=53 // loop_header
          %s166 = sphi 0, %s170
          %p167 = scmp.ge.s32.totalorder %s166, 8
        $region58: #{custom-call.19} parent=53 // loop_header_branch
          %169 = sbr.rel (%p167) target = $region62
        $region59: #{custom-call.19} parent=53 // loop_body
          %v171 = vstv %s166
          %v172 = vlaneseq
          %v173 = vshrl.u32 %v172, 7
          %v174 = vmov %v173
          %v175 = vld [vmem:[%s138] sm:$0xff]
          %v176 = vand.u32 2147483647, %v175
          %v178 = vstv %s166
          %vm179 = vcmp.ge.s32.totalorder %v174, %v178
          %vm180 = vcmp.lt.s32.totalorder %v174, 8
          %vm181 = vmand %vm179, %vm180
          %vm182 = vcmp.lt.f32.partialorder -inf, %v176
          %vm183 = vmand %vm181, %vm182
          %v184 = vsel %vm183, %v174, %v171
          %v185 = vsel %vm183, %v176, -inf
          %v186 = vrot.slane %v185, 1
          %v187 = vrot.slane %v184, 1
          %vm188 = vcmp.ge.f32.partialorder %v186, %v185
          %v189 = vsel %vm188, %v186, %v185
          %v190 = vsel %vm188, %v187, %v184
          %v191 = vrot.slane %v186, 1
          %v192 = vrot.slane %v187, 1
          %vm193 = vcmp.ge.f32.partialorder %v191, %v189
          %v194 = vsel %vm193, %v191, %v189
          %v195 = vsel %vm193, %v192, %v190
          %v196 = vrot.slane %v191, 1
          %v197 = vrot.slane %v192, 1
          %vm198 = vcmp.ge.f32.partialorder %v196, %v194
          %v199 = vsel %vm198, %v196, %v194
          %v200 = vsel %vm198, %v197, %v195
          %v201 = vrot.slane %v196, 1
          %v202 = vrot.slane %v197, 1
          %vm203 = vcmp.ge.f32.partialorder %v201, %v199
          %v204 = vsel %vm203, %v201, %v199
          %v205 = vsel %vm203, %v202, %v200
          %v206 = vrot.slane %v201, 1
          %v207 = vrot.slane %v202, 1
          %vm208 = vcmp.ge.f32.partialorder %v206, %v204
          %v209 = vsel %vm208, %v206, %v204
          %v210 = vsel %vm208, %v207, %v205
          %v211 = vrot.slane %v206, 1
          %v212 = vrot.slane %v207, 1
          %vm213 = vcmp.ge.f32.partialorder %v211, %v209
          %v214 = vsel %vm213, %v211, %v209
          %v215 = vsel %vm213, %v212, %v210
          %v216 = vrot.slane %v211, 1
          %v217 = vrot.slane %v212, 1
          %vm218 = vcmp.ge.f32.partialorder %v216, %v214
          %v219 = vsel %vm218, %v216, %v214
          %v220 = vsel %vm218, %v217, %v215
          %s221 = ssub.s32 128, %s166
          %222 = vrot.lane.b32.xlu0 %v220, %s221
          %v223 = vpop.permute.xlu0 %222
          %s224 = vtos %v223
          %v225 = vstv %s166
          %v226 = vlaneseq
          %v227 = vand.u32 %v226, 127
          %vm228 = vcmp.eq.s32.totalorder %v227, %v225
          %v229 = vstv %s224
          %v230 = vld [vmem:[%s156] ss:$0 sm:$0xff]
          %v231 = vsel %vm228, %v229, %v230
          %232 = vst [vmem:[%s156] sm:$0x1] %v231
          %s233 = scalar_lea.vmem %s138, %s166 [#allocation1]
          %s234 = scalar_lea.vmem %s138, %s224 [#allocation1]
          %v235 = vld [vmem:[%s233] ss:$0 sm:$0xff]
          %v236 = vld [vmem:[%s234] ss:$0 sm:$0xff]
          %237 = vst [vmem:[%s234] sm:$0x1] %v235
          %238 = vst [vmem:[%s233] sm:$0x1] %v236
          %s239 = scalar_lea.vmem [#allocation6], %s166
          %s240 = scalar_lea.vmem [#allocation6], %s224
          %v241 = vld [vmem:[%s239] ss:$0 sm:$0xff]
          %v242 = vld [vmem:[%s240] ss:$0 sm:$0xff]
          %243 = vst [vmem:[%s240] sm:$0x1] %v241
          %244 = vst [vmem:[%s239] sm:$0x1] %v242
          %vm245 = vcmp.ne.f32.partialorder %v236, 0.0
          %vm246 = vmand %vm228, %vm245
          %v247 = vsel %vm246, %v236, 1.0
          %v248 = vlaneseq
          %v249 = vand.u32 %v248, 127
          %v250 = vstv %s166
          %vm251 = vcmp.gt.s32.totalorder %v249, %v250
          %v252 = vsel %vm251, %v236, 0.0
          %v253 = vlaneseq
          %v254 = vshrl.u32 %v253, 7
          %v255 = vmov %v254
          %v256 = vld [vmem:[%s138] sm:$0xff]
          %v258 = vstv %s166
          %vm259 = vcmp.gt.s32.totalorder %v255, %v258
          %v260 = vsel %vm259, %v247, 1.0
          %v261 = vrcp.pop %v260
          %v262 = vmul.f32 %v260, %v261
          %v263 = vsub.f32 1.0, %v262
          %v264 = vmul.f32 %v261, %v263
          %v265 = vadd.f32 %v261, %v264
          %vm266 = vweird.f32 %v260
          %vm267 = vweird.f32 %v261
          %vm268 = vmor %vm266, %vm267
          %v269 = vsel %vm268, %v261, %v265
          %v270 = vand.u32 2147483647, %v260
          %vm271 = vcmp.eq.f32.partialorder %v270, 8.507059e+37
          %v272 = vand.u32 %v260, 2147483648
          %v273 = vor.u32 1.1754944e-38, %v272
          %v274 = vsel %vm271, %v273, %v269
          %v275 = vmul.f32 %v256, %v274
          %vm276 = vmand %vm259, %vm228
          %v277 = vsel %vm276, %v275, 0.0
          %278 = vadd.xlane.f32.xlu0 %v277
          %v279 = vpop.xlane.xlu0 %278
          %v280 = vmul.f32 %v279, %v252
          %v281 = vsub.f32 %v275, %v280
          %282 = vst [vmem:[%s138] sm:$0xff] %v281
        $region60: #{custom-call.19} parent=53 // loop_footer
          %s170 = sadd.s32 1, %s166
        $region61: #{custom-call.19} parent=53 // loop_footer_branch
          %165 = sbr.rel target = $region57
        $region62: #{custom-call.19} parent=53 // loop_exit
          _
        %v283 = vld [vmem:[#allocation6] sm:$0xff]
        %s284 = scalar_lea.vmem [#allocation6], 8
        %s285 = scalar_lea.vmem [#allocation6], 16
        %s286 = scalar_lea.vmem [#allocation6], 24
        %s287 = scalar_lea.vmem [#allocation6], 32
        %s288 = scalar_lea.vmem [#allocation6], 40
        %s289 = scalar_lea.vmem [#allocation6], 48
        %s290 = scalar_lea.vmem [#allocation6], 56
        %s291 = scalar_lea.vmem [#allocation6], 64
        %s292 = scalar_lea.vmem [#allocation6], 72
        %s293 = scalar_lea.vmem [#allocation6], 80
        %s294 = scalar_lea.vmem [#allocation6], 88
        %s295 = scalar_lea.vmem [#allocation6], 96
        %s296 = scalar_lea.vmem [#allocation6], 104
        %s297 = scalar_lea.vmem [#allocation6], 112
        %s298 = scalar_lea.vmem [#allocation6], 120
        %299 = vxpose.xlu0.b32.start [1/16] %v283, 128
        %300 = vxpose.xlu0.b32.cont [2/16] 0, 128
        %301 = vxpose.xlu0.b32.cont [3/16] 0, 128
        %302 = vxpose.xlu0.b32.cont [4/16] 0, 128
        %303 = vxpose.xlu0.b32.cont [5/16] 0, 128
        %304 = vxpose.xlu0.b32.cont [6/16] 0, 128
        %305 = vxpose.xlu0.b32.cont [7/16] 0, 128
        %306 = vxpose.xlu0.b32.cont [8/16] 0, 128
        %307 = vxpose.xlu0.b32.cont [9/16] 0, 128
        %308 = vxpose.xlu0.b32.cont [10/16] 0, 128
        %309 = vxpose.xlu0.b32.cont [11/16] 0, 128
        %310 = vxpose.xlu0.b32.cont [12/16] 0, 128
        %311 = vxpose.xlu0.b32.cont [13/16] 0, 128
        %312 = vxpose.xlu0.b32.cont [14/16] 0, 128
        %313 = vxpose.xlu0.b32.cont [15/16] 0, 128
        %314 = vxpose.xlu0.b32.end [16/16] 0, 128
        %v315 = vpop.trf.xlu0
        %v316 = vpop.trf.xlu0
        %v317 = vpop.trf.xlu0
        %v318 = vpop.trf.xlu0
        %v319 = vpop.trf.xlu0
        %v320 = vpop.trf.xlu0
        %v321 = vpop.trf.xlu0
        %v322 = vpop.trf.xlu0
        %v323 = vpop.trf.xlu0
        %v324 = vpop.trf.xlu0
        %v325 = vpop.trf.xlu0
        %v326 = vpop.trf.xlu0
        %v327 = vpop.trf.xlu0
        %v328 = vpop.trf.xlu0
        %v329 = vpop.trf.xlu0
        %v330 = vpop.trf.xlu0
        %331 = vst [vmem:[%s158] sm:$0x1] %v315
        %s333 = ssub.s32 16, 1
        %v334 = vld [vmem:[#allocation2] sm:%s333]
        %s336 = ssub.s32 16, 1
        %337 = vst [vmem:[%s144] sm:%s336] %v334
        %s339 = ssub.s32 16, 1
        %v340 = vld [vmem:[#allocation4] sm:%s339]
        %s342 = ssub.s32 16, 1
        %343 = vst [vmem:[%s150] sm:%s342] %v340
        %s344 = sand.u32 %s11, 1
        %s345 = sand.u32 %s11, 1
        %s346 = smul.addr %s345, 8
        %s347 = scalar_lea.vmem [#allocation1], %s346
        %s348 = sand.u32 %s21, 1
        %s349 = sand.u32 %s21, 1
        %s350 = smul.addr %s349, 4
        %s351 = scalar_lea.vmem [#allocation3], %s350
        %s352 = sand.u32 %s49, 1
        %s353 = sand.u32 %s49, 1
        %s354 = smul.addr %s353, 4
        %s355 = scalar_lea.vmem [#allocation5], %s354
        %s356 = smul.addr %s11, 8
        %s357 = scalar_lea.vmem %s1, %s356
        // Predicated region
        $region63: #{custom-call.19} parent=53 // pred_check
          _
        $region64: #{custom-call.19} parent=53 // pred_check_branch
          %359 = sbr.rel (0) target = $region66
        $region65: #{custom-call.19} parent=53 // pred_region
          // Predicated region
          $region67: #{custom-call.19} parent=65 // pred_check
            _
          $region68: #{custom-call.19} parent=65 // pred_check_branch
            %361 = sbr.rel (0) target = $region70
          $region69: #{custom-call.19} parent=65 // pred_region
            // Predicated region
            $region82: #{custom-call.19} parent=69 // pred_check
              _
            $region83: #{custom-call.19} parent=69 // pred_check_branch
              %377 = sbr.rel (0) target = $region85
            $region84: #{custom-call.19} parent=69 // pred_region
              loop: start=0, step=1, limit=1
              $region86: #{custom-call.19} parent=84 // loop_pre_header
                _
              $region87: #{custom-call.19} parent=84 // loop_header
                %s379 = sphi 0, %s383
                %p380 = scmp.ge.s32.totalorder %s379, 1
                %s384 = sphi %s347, %s347
                %s385 = sphi %s357, %s357
              $region88: #{custom-call.19} parent=84 // loop_header_branch
                %382 = sbr.rel (%p380) target = $region92
              $region89: #{custom-call.19} parent=84 // loop_body
                %v386 = vld [vmem:[%s384] sm:$0xff]
                %387 = vst [vmem:[%s385] sm:$0xff] %v386
              $region90: #{custom-call.19} parent=84 // loop_footer
                %s383 = sadd.s32 1, %s379
              $region91: #{custom-call.19} parent=84 // loop_footer_branch
                %378 = sbr.rel target = $region87
              $region92: #{custom-call.19} parent=84 // loop_exit
                _
            $region85: #{custom-call.19} parent=69 // pred_fallthru
              _
            // Predicated region
            $region93: #{custom-call.19} parent=69 // pred_check
              _
            $region94: #{custom-call.19} parent=69 // pred_check_branch
              %389 = sbr.rel target = $region96
            $region95: #{custom-call.19} parent=69 // pred_region
              _
            $region96: #{custom-call.19} parent=69 // pred_fallthru
              _
          $region70: #{custom-call.19} parent=65 // pred_fallthru
            _
          // Predicated region
          $region71: #{custom-call.19} parent=65 // pred_check
            _
          $region72: #{custom-call.19} parent=65 // pred_check_branch
            %363 = sbr.rel target = $region74
          $region73: #{custom-call.19} parent=65 // pred_region
            %s365 = ssub.s32 256, 1
            loop: start=0, step=1, limit=1
            $region75: #{custom-call.19} parent=73 // loop_pre_header
              _
            $region76: #{custom-call.19} parent=73 // loop_header
              %s367 = sphi 0, %s371
              %p368 = scmp.ge.s32.totalorder %s367, 1
              %s372 = sphi %s347, %s347
              %s373 = sphi %s357, %s357
            $region77: #{custom-call.19} parent=73 // loop_header_branch
              %370 = sbr.rel (%p368) target = $region81
            $region78: #{custom-call.19} parent=73 // loop_body
              %v374 = vld [vmem:[%s372] sm:%s365]
              %375 = vst [vmem:[%s373] sm:%s365] %v374
            $region79: #{custom-call.19} parent=73 // loop_footer
              %s371 = sadd.s32 1, %s367
            $region80: #{custom-call.19} parent=73 // loop_footer_branch
              %366 = sbr.rel target = $region76
            $region81: #{custom-call.19} parent=73 // loop_exit
              _
          $region74: #{custom-call.19} parent=65 // pred_fallthru
            _
        $region66: #{custom-call.19} parent=53 // pred_fallthru
          _
        %390 = vnop
        // Predicated region
        $region97: #{custom-call.19} parent=53 // pred_check
          %p391 = pneg %p31
        $region98: #{custom-call.19} parent=53 // pred_check_branch
          %393 = sbr.rel (%p391) target = $region100
        $region99: #{custom-call.19} parent=53 // pred_region
          %s394 = sshrl.u32 %s11, 3
          %s395 = smul.addr %s394, 4
          %s396 = scalar_lea.vmem %s2, %s395
          // Predicated region
          $region101: #{custom-call.19} parent=99 // pred_check
            _
          $region102: #{custom-call.19} parent=99 // pred_check_branch
            %398 = sbr.rel (0) target = $region104
          $region103: #{custom-call.19} parent=99 // pred_region
            // Predicated region
            $region105: #{custom-call.19} parent=103 // pred_check
              _
            $region106: #{custom-call.19} parent=103 // pred_check_branch
              %400 = sbr.rel target = $region108
            $region107: #{custom-call.19} parent=103 // pred_region
              // Predicated region
              $region120: #{custom-call.19} parent=107 // pred_check
                _
              $region121: #{custom-call.19} parent=107 // pred_check_branch
                %416 = sbr.rel (0) target = $region123
              $region122: #{custom-call.19} parent=107 // pred_region
                %s418 = ssub.s32 16, 1
                loop: start=0, step=1, limit=1
                $region124: #{custom-call.19} parent=122 // loop_pre_header
                  _
                $region125: #{custom-call.19} parent=122 // loop_header
                  %s420 = sphi 0, %s424
                  %p421 = scmp.ge.s32.totalorder %s420, 1
                  %s425 = sphi %s351, %s351
                  %s426 = sphi %s396, %s396
                $region126: #{custom-call.19} parent=122 // loop_header_branch
                  %423 = sbr.rel (%p421) target = $region130
                $region127: #{custom-call.19} parent=122 // loop_body
                  %v427 = vld [vmem:[%s425] sm:%s418]
                  %428 = vst [vmem:[%s426] sm:%s418] %v427
                $region128: #{custom-call.19} parent=122 // loop_footer
                  %s424 = sadd.s32 1, %s420
                $region129: #{custom-call.19} parent=122 // loop_footer_branch
                  %419 = sbr.rel target = $region125
                $region130: #{custom-call.19} parent=122 // loop_exit
                  _
              $region123: #{custom-call.19} parent=107 // pred_fallthru
                _
            $region108: #{custom-call.19} parent=103 // pred_fallthru
              _
            // Predicated region
            $region109: #{custom-call.19} parent=103 // pred_check
              _
            $region110: #{custom-call.19} parent=103 // pred_check_branch
              %402 = sbr.rel (0) target = $region112
            $region111: #{custom-call.19} parent=103 // pred_region
              %s404 = ssub.s32 16, 1
              loop: start=0, step=1, limit=1
              $region113: #{custom-call.19} parent=111 // loop_pre_header
                _
              $region114: #{custom-call.19} parent=111 // loop_header
                %s406 = sphi 0, %s410
                %p407 = scmp.ge.s32.totalorder %s406, 1
                %s411 = sphi %s351, %s351
                %s412 = sphi %s396, %s396
              $region115: #{custom-call.19} parent=111 // loop_header_branch
                %409 = sbr.rel (%p407) target = $region119
              $region116: #{custom-call.19} parent=111 // loop_body
                %v413 = vld [vmem:[%s411] sm:%s404]
                %414 = vst [vmem:[%s412] sm:%s404] %v413
              $region117: #{custom-call.19} parent=111 // loop_footer
                %s410 = sadd.s32 1, %s406
              $region118: #{custom-call.19} parent=111 // loop_footer_branch
                %405 = sbr.rel target = $region114
              $region119: #{custom-call.19} parent=111 // loop_exit
                _
            $region112: #{custom-call.19} parent=103 // pred_fallthru
              _
          $region104: #{custom-call.19} parent=99 // pred_fallthru
            _
          %429 = vnop
        $region100: #{custom-call.19} parent=53 // pred_fallthru
          _
        // Predicated region
        $region131: #{custom-call.19} parent=53 // pred_check
          %p430 = pneg %p59
        $region132: #{custom-call.19} parent=53 // pred_check_branch
          %432 = sbr.rel (%p430) target = $region134
        $region133: #{custom-call.19} parent=53 // pred_region
          %s433 = sshrl.u32 %s11, 3
          %s434 = smul.addr %s433, 4
          %s435 = scalar_lea.vmem %s3, %s434
          // Predicated region
          $region135: #{custom-call.19} parent=133 // pred_check
            _
          $region136: #{custom-call.19} parent=133 // pred_check_branch
            %437 = sbr.rel (0) target = $region138
          $region137: #{custom-call.19} parent=133 // pred_region
            // Predicated region
            $region139: #{custom-call.19} parent=137 // pred_check
              _
            $region140: #{custom-call.19} parent=137 // pred_check_branch
              %439 = sbr.rel target = $region142
            $region141: #{custom-call.19} parent=137 // pred_region
              // Predicated region
              $region154: #{custom-call.19} parent=141 // pred_check
                _
              $region155: #{custom-call.19} parent=141 // pred_check_branch
                %455 = sbr.rel (0) target = $region157
              $region156: #{custom-call.19} parent=141 // pred_region
                %s457 = ssub.s32 16, 1
                loop: start=0, step=1, limit=1
                $region158: #{custom-call.19} parent=156 // loop_pre_header
                  _
                $region159: #{custom-call.19} parent=156 // loop_header
                  %s459 = sphi 0, %s463
                  %p460 = scmp.ge.s32.totalorder %s459, 1
                  %s464 = sphi %s355, %s355
                  %s465 = sphi %s435, %s435
                $region160: #{custom-call.19} parent=156 // loop_header_branch
                  %462 = sbr.rel (%p460) target = $region164
                $region161: #{custom-call.19} parent=156 // loop_body
                  %v466 = vld [vmem:[%s464] sm:%s457]
                  %467 = vst [vmem:[%s465] sm:%s457] %v466
                $region162: #{custom-call.19} parent=156 // loop_footer
                  %s463 = sadd.s32 1, %s459
                $region163: #{custom-call.19} parent=156 // loop_footer_branch
                  %458 = sbr.rel target = $region159
                $region164: #{custom-call.19} parent=156 // loop_exit
                  _
              $region157: #{custom-call.19} parent=141 // pred_fallthru
                _
            $region142: #{custom-call.19} parent=137 // pred_fallthru
              _
            // Predicated region
            $region143: #{custom-call.19} parent=137 // pred_check
              _
            $region144: #{custom-call.19} parent=137 // pred_check_branch
              %441 = sbr.rel (0) target = $region146
            $region145: #{custom-call.19} parent=137 // pred_region
              %s443 = ssub.s32 16, 1
              loop: start=0, step=1, limit=1
              $region147: #{custom-call.19} parent=145 // loop_pre_header
                _
              $region148: #{custom-call.19} parent=145 // loop_header
                %s445 = sphi 0, %s449
                %p446 = scmp.ge.s32.totalorder %s445, 1
                %s450 = sphi %s355, %s355
                %s451 = sphi %s435, %s435
              $region149: #{custom-call.19} parent=145 // loop_header_branch
                %448 = sbr.rel (%p446) target = $region153
              $region150: #{custom-call.19} parent=145 // loop_body
                %v452 = vld [vmem:[%s450] sm:%s443]
                %453 = vst [vmem:[%s451] sm:%s443] %v452
              $region151: #{custom-call.19} parent=145 // loop_footer
                %s449 = sadd.s32 1, %s445
              $region152: #{custom-call.19} parent=145 // loop_footer_branch
                %444 = sbr.rel target = $region148
              $region153: #{custom-call.19} parent=145 // loop_exit
                _
            $region146: #{custom-call.19} parent=137 // pred_fallthru
              _
          $region138: #{custom-call.19} parent=133 // pred_fallthru
            _
          %468 = vnop
        $region134: #{custom-call.19} parent=53 // pred_fallthru
          _
      $region54: #{custom-call.19} parent=5 // pred_fallthru
        _
      %p469 = scmp.le.s32.totalorder 2, %s6
      // Predicated region
      $region165: #{custom-call.19} parent=5 // pred_check
        %p470 = pneg %p469
      $region166: #{custom-call.19} parent=5 // pred_check_branch
        %472 = sbr.rel (%p470) target = $region168
      $region167: #{custom-call.19} parent=5 // pred_region
        %s473 = ssub.s32 %s6, 2
        %s474 = sand.u32 %s12, 1
        %s475 = sand.u32 %s12, 1
        %s476 = smul.addr %s475, 8
        %s477 = scalar_lea.vmem [#allocation1], %s476
        // Predicated region
        $region169: #{custom-call.19} parent=167 // pred_check
          %p478 = pneg %p37
        $region170: #{custom-call.19} parent=167 // pred_check_branch
          %480 = sbr.rel (%p478) target = $region172
        $region171: #{custom-call.19} parent=167 // pred_region
          %s481 = sand.u32 %s22, 1
          %s482 = sand.u32 %s22, 1
          %s483 = smul.addr %s482, 4
          %s484 = scalar_lea.vmem [#allocation3], %s483
        $region172: #{custom-call.19} parent=167 // pred_fallthru
          _
        // Predicated region
        $region173: #{custom-call.19} parent=167 // pred_check
          %p485 = pneg %p65
        $region174: #{custom-call.19} parent=167 // pred_check_branch
          %487 = sbr.rel (%p485) target = $region176
        $region175: #{custom-call.19} parent=167 // pred_region
          %s488 = sand.u32 %s50, 1
          %s489 = sand.u32 %s50, 1
          %s490 = smul.addr %s489, 4
          %s491 = scalar_lea.vmem [#allocation5], %s490
        $region176: #{custom-call.19} parent=167 // pred_fallthru
          _
      $region168: #{custom-call.19} parent=5 // pred_fallthru
        _
    $region6: #{custom-call.19} parent=1 // loop_footer
      %s10 = sadd.s32 1, %s6
    $region7: #{custom-call.19} parent=1 // loop_footer_branch
      %5 = sbr.rel target = $region3
    $region8: #{custom-call.19} parent=1 // loop_exit
      _

// kernel: custom-call.10
$region0: #{custom-call.10}
  %s0 = inlined_call_operand.vmem [shape: f32[4,1,8,8], index: 0, kind: input, shape index: {}]
  %s1 = inlined_call_operand.vmem [shape: f32[4,1,8,8], index: 1, kind: output, shape index: {}]
  $region1: #{custom-call.10} parent=0
    #allocation0 [shape = 'u8[8192]{0}', space=vmem, size = 0x2000, scoped, tag = 'operand span for operand 0']
    #allocation1 [shape = 'u8[8192]{0}', space=vmem, size = 0x2000, scoped, tag = 'operand span for operand 1']
    loop: start=0, step=1, limit=6
    $region2: #{custom-call.10} parent=1 // loop_pre_header
      _
    $region3: #{custom-call.10} parent=1 // loop_header
      %s3 = sphi 0, %s7
      %p4 = scmp.ge.s32.totalorder %s3, 6
      %s10 = sphi 0, %s36
      %s11 = sphi 0, %s32
      %s12 = sphi 0, %s28
      %s13 = sphi 0, %s24
      %s14 = sphi 0, %s10
      %s15 = sphi 0, %s11
      %s16 = sphi 0, %s12
      %s17 = sphi 0, %s13
      %s18 = sphi 0, %s14
      %s19 = sphi 0, %s15
      %s20 = sphi 0, %s16
      %s21 = sphi 0, %s17
    $region4: #{custom-call.10} parent=1 // loop_header_branch
      %6 = sbr.rel (%p4) target = $region8
    $region5: #{custom-call.10} parent=1 // loop_body
      %s8 = ssub.s32 %s3, 1
      %s9 = ssub.s32 %s3, 2
      %s22 = sadd.s32 1, %s13
      %p23 = scmp.ge.s32.totalorder %s22, 1
      %s24 = scalar_select %p23, 0, %s22
      %s25 = sadd.s32 1, %s12
      %s26 = scalar_select %p23, %s25, %s12
      %p27 = scmp.ge.s32.totalorder %s26, 1
      %s28 = scalar_select %p27, 0, %s26
      %s29 = sadd.s32 1, %s11
      %s30 = scalar_select %p27, %s29, %s11
      %p31 = scmp.ge.s32.totalorder %s30, 1
      %s32 = scalar_select %p31, 0, %s30
      %s33 = sadd.s32 1, %s10
      %s34 = scalar_select %p31, %s33, %s10
      %p35 = scmp.ge.s32.totalorder %s34, 4
      %s36 = scalar_select %p35, 0, %s34
      %p37 = scmp.le.s32.totalorder 1, %s3
      %p38 = scmp.lt.s32.totalorder %s3, 5
      %p39 = pnand %p37, %p38
      %p40 = pneg %p39
      // Predicated region
      $region9: #{custom-call.10} parent=5 // pred_check
        _
      $region10: #{custom-call.10} parent=5 // pred_check_branch
        %42 = sbr.rel (%p39) target = $region12
      $region11: #{custom-call.10} parent=5 // pred_region
        %s43 = ssub.s32 %s3, 1
      $region12: #{custom-call.10} parent=5 // pred_fallthru
        _
      %p44 = scmp.lt.s32.totalorder %s3, 4
      // Predicated region
      $region13: #{custom-call.10} parent=5 // pred_check
        %p45 = pneg %p44
      $region14: #{custom-call.10} parent=5 // pred_check_branch
        %47 = sbr.rel (%p45) target = $region16
      $region15: #{custom-call.10} parent=5 // pred_region
        %s48 = sand.u32 %s3, 1
        %s49 = sand.u32 %s3, 1
        %s50 = smul.addr %s49, 8
        %s51 = scalar_lea.vmem [#allocation0], %s50
        %s52 = sadd.s32 %s13, %s12
        %s53 = sadd.s32 %s52, %s11
        %s54 = sadd.s32 %s53, %s10
        %s55 = smul.addr %s54, 8
        %s56 = scalar_lea.vmem %s0, %s55
        // Predicated region
        $region17: #{custom-call.10} parent=15 // pred_check
          _
        $region18: #{custom-call.10} parent=15 // pred_check_branch
          %58 = sbr.rel (0) target = $region20
        $region19: #{custom-call.10} parent=15 // pred_region
          // Predicated region
          $region21: #{custom-call.10} parent=19 // pred_check
            _
          $region22: #{custom-call.10} parent=19 // pred_check_branch
            %60 = sbr.rel (0) target = $region24
          $region23: #{custom-call.10} parent=19 // pred_region
            // Predicated region
            $region36: #{custom-call.10} parent=23 // pred_check
              _
            $region37: #{custom-call.10} parent=23 // pred_check_branch
              %76 = sbr.rel (0) target = $region39
            $region38: #{custom-call.10} parent=23 // pred_region
              loop: start=0, step=1, limit=1
              $region40: #{custom-call.10} parent=38 // loop_pre_header
                _
              $region41: #{custom-call.10} parent=38 // loop_header
                %s78 = sphi 0, %s82
                %p79 = scmp.ge.s32.totalorder %s78, 1
                %s83 = sphi %s56, %s56
                %s84 = sphi %s51, %s51
              $region42: #{custom-call.10} parent=38 // loop_header_branch
                %81 = sbr.rel (%p79) target = $region46
              $region43: #{custom-call.10} parent=38 // loop_body
                %v85 = vld [vmem:[%s83] sm:$0xff]
                %86 = vst [vmem:[%s84] sm:$0xff] %v85
              $region44: #{custom-call.10} parent=38 // loop_footer
                %s82 = sadd.s32 1, %s78
              $region45: #{custom-call.10} parent=38 // loop_footer_branch
                %77 = sbr.rel target = $region41
              $region46: #{custom-call.10} parent=38 // loop_exit
                _
            $region39: #{custom-call.10} parent=23 // pred_fallthru
              _
            // Predicated region
            $region47: #{custom-call.10} parent=23 // pred_check
              _
            $region48: #{custom-call.10} parent=23 // pred_check_branch
              %88 = sbr.rel target = $region50
            $region49: #{custom-call.10} parent=23 // pred_region
              _
            $region50: #{custom-call.10} parent=23 // pred_fallthru
              _
          $region24: #{custom-call.10} parent=19 // pred_fallthru
            _
          // Predicated region
          $region25: #{custom-call.10} parent=19 // pred_check
            _
          $region26: #{custom-call.10} parent=19 // pred_check_branch
            %62 = sbr.rel target = $region28
          $region27: #{custom-call.10} parent=19 // pred_region
            %s64 = ssub.s32 256, 1
            loop: start=0, step=1, limit=1
            $region29: #{custom-call.10} parent=27 // loop_pre_header
              _
            $region30: #{custom-call.10} parent=27 // loop_header
              %s66 = sphi 0, %s70
              %p67 = scmp.ge.s32.totalorder %s66, 1
              %s71 = sphi %s56, %s56
              %s72 = sphi %s51, %s51
            $region31: #{custom-call.10} parent=27 // loop_header_branch
              %69 = sbr.rel (%p67) target = $region35
            $region32: #{custom-call.10} parent=27 // loop_body
              %v73 = vld [vmem:[%s71] sm:%s64]
              %74 = vst [vmem:[%s72] sm:%s64] %v73
            $region33: #{custom-call.10} parent=27 // loop_footer
              %s70 = sadd.s32 1, %s66
            $region34: #{custom-call.10} parent=27 // loop_footer_branch
              %65 = sbr.rel target = $region30
            $region35: #{custom-call.10} parent=27 // loop_exit
              _
          $region28: #{custom-call.10} parent=19 // pred_fallthru
            _
        $region20: #{custom-call.10} parent=15 // pred_fallthru
          _
        %89 = vnop
      $region16: #{custom-call.10} parent=5 // pred_fallthru
        _
      %p90 = scmp.le.s32.totalorder 1, %s3
      %p91 = scmp.lt.s32.totalorder %s3, 5
      %p92 = pnand %p90, %p91
      %p93 = pneg %p92
      // Predicated region
      $region51: #{custom-call.10} parent=5 // pred_check
        _
      $region52: #{custom-call.10} parent=5 // pred_check_branch
        %95 = sbr.rel (%p92) target = $region54
      $region53: #{custom-call.10} parent=5 // pred_region
        #allocation2 [shape = 'f32[8,8]{1,0}', space=vmem, size = 0x1000, scoped, tag = 'rescaled input a']
        %s96 = ssub.s32 %s3, 1
        %s97 = sand.u32 %s8, 1
        %s98 = sand.u32 %s8, 1
        %s99 = smul.addr %s98, 8
        %s100 = scalar_lea.vmem [#allocation0], %s99
        %s101 = sand.u32 %s8, 1
        %s102 = sand.u32 %s8, 1
        %s103 = smul.addr %s102, 8
        %s104 = scalar_lea.vmem [#allocation0], %s103
        %s105 = sand.u32 %s8, 1
        %s106 = sand.u32 %s8, 1
        %s107 = smul.addr %s106, 8
        %s108 = scalar_lea.vmem [#allocation1], %s107
        %v109 = vlaneseq
        %v110 = vand.u32 %v109, 127
        %vm111 = vcmp.lt.s32.totalorder %v110, 8
        %v112 = vlaneseq
        %v113 = vshrl.u32 %v112, 7
        %vm115 = vcmp.eq.s32.totalorder %v113, %v110
        %v116 = vld [vmem:[%s100] sm:$0xff]
        %v117 = vsel %vm115, %v116, 0.0
        %118 = vadd.xlane.f32.xlu0 %v117
        %v119 = vpop.xlane.xlu0 %118
        %vm120 = vcmp.ge.s32.totalorder %v113, %v110
        %vm121 = vmand %vm120, %vm111
        %v122 = vsel %vm121, %v116, 0.0
        %v123 = vrcp.pop %v119
        %v124 = vmul.f32 %v119, %v123
        %v125 = vsub.f32 1.0, %v124
        %v126 = vmul.f32 %v123, %v125
        %v127 = vadd.f32 %v123, %v126
        %vm128 = vweird.f32 %v119
        %vm129 = vweird.f32 %v123
        %vm130 = vmor %vm128, %vm129
        %v131 = vsel %vm130, %v123, %v127
        %v132 = vand.u32 2147483647, %v119
        %vm133 = vcmp.eq.f32.partialorder %v132, 8.507059e+37
        %v134 = vand.u32 %v119, 2147483648
        %v135 = vor.u32 1.1754944e-38, %v134
        %v136 = vsel %vm133, %v135, %v131
        %v137 = vmul.f32 %v122, %v136
        %138 = vst [vmem:[#allocation2] sm:$0xff] %v137
        %v139 = vlaneseq
        %v140 = vand.u32 %v139, 127
        %v141 = vlaneseq
        %v142 = vshrl.u32 %v141, 7
        %vm144 = vcmp.eq.s32.totalorder %v140, %v142
        %v145 = vlaneseq
        %v146 = vand.u32 %v145, 127
        %vm147 = vcmp.eq.s32.totalorder %v146, 0
        %v148 = vsel %vm147, 1.0, -1.0
        %v149 = vsel %vm144, %v148, 0.0
        %s150 = scalar_lea.vmem [#allocation2], 1
        %v151 = vld [vmem:[%s150] ss:$0 sm:$0xff]
        %v152 = vxor.u32 %v151, 2147483648
        %v153 = vlaneseq
        %v154 = vand.u32 %v153, 127
        %vm155 = vcmp.eq.s32.totalorder %v154, 1
        %v156 = vmul.f32 %v152, %v149
        %157 = vadd.xlane.f32.xlu0 %v156
        %v158 = vpop.xlane.xlu0 %157
        %v159 = vsel %vm155, %v158, %v149
        %s160 = scalar_lea.vmem [#allocation2], 2
        %v161 = vld [vmem:[%s160] ss:$0 sm:$0xff]
        %v162 = vxor.u32 %v161, 2147483648
        %v163 = vlaneseq
        %v164 = vand.u32 %v163, 127
        %vm165 = vcmp.eq.s32.totalorder %v164, 2
        %v166 = vmul.f32 %v162, %v159
        %167 = vadd.xlane.f32.xlu0 %v166
        %v168 = vpop.xlane.xlu0 %167
        %v169 = vsel %vm165, %v168, %v159
        %s170 = scalar_lea.vmem [#allocation2], 3
        %v171 = vld [vmem:[%s170] ss:$0 sm:$0xff]
        %v172 = vxor.u32 %v171, 2147483648
        %v173 = vlaneseq
        %v174 = vand.u32 %v173, 127
        %vm175 = vcmp.eq.s32.totalorder %v174, 3
        %v176 = vmul.f32 %v172, %v169
        %177 = vadd.xlane.f32.xlu0 %v176
        %v178 = vpop.xlane.xlu0 %177
        %v179 = vsel %vm175, %v178, %v169
        %s180 = scalar_lea.vmem [#allocation2], 4
        %v181 = vld [vmem:[%s180] ss:$0 sm:$0xff]
        %v182 = vxor.u32 %v181, 2147483648
        %v183 = vlaneseq
        %v184 = vand.u32 %v183, 127
        %vm185 = vcmp.eq.s32.totalorder %v184, 4
        %v186 = vmul.f32 %v182, %v179
        %187 = vadd.xlane.f32.xlu0 %v186
        %v188 = vpop.xlane.xlu0 %187
        %v189 = vsel %vm185, %v188, %v179
        %s190 = scalar_lea.vmem [#allocation2], 5
        %v191 = vld [vmem:[%s190] ss:$0 sm:$0xff]
        %v192 = vxor.u32 %v191, 2147483648
        %v193 = vlaneseq
        %v194 = vand.u32 %v193, 127
        %vm195 = vcmp.eq.s32.totalorder %v194, 5
        %v196 = vmul.f32 %v192, %v189
        %197 = vadd.xlane.f32.xlu0 %v196
        %v198 = vpop.xlane.xlu0 %197
        %v199 = vsel %vm195, %v198, %v189
        %s200 = scalar_lea.vmem [#allocation2], 6
        %v201 = vld [vmem:[%s200] ss:$0 sm:$0xff]
        %v202 = vxor.u32 %v201, 2147483648
        %v203 = vlaneseq
        %v204 = vand.u32 %v203, 127
        %vm205 = vcmp.eq.s32.totalorder %v204, 6
        %v206 = vmul.f32 %v202, %v199
        %207 = vadd.xlane.f32.xlu0 %v206
        %v208 = vpop.xlane.xlu0 %207
        %v209 = vsel %vm205, %v208, %v199
        %s210 = scalar_lea.vmem [#allocation2], 7
        %v211 = vld [vmem:[%s210] ss:$0 sm:$0xff]
        %v212 = vxor.u32 %v211, 2147483648
        %v213 = vlaneseq
        %v214 = vand.u32 %v213, 127
        %vm215 = vcmp.eq.s32.totalorder %v214, 7
        %v216 = vmul.f32 %v212, %v209
        %217 = vadd.xlane.f32.xlu0 %v216
        %v218 = vpop.xlane.xlu0 %217
        %v219 = vsel %vm215, %v218, %v209
        %v220 = vrcp.pop %v119
        %v221 = vmul.f32 %v119, %v220
        %v222 = vsub.f32 1.0, %v221
        %v223 = vmul.f32 %v220, %v222
        %v224 = vadd.f32 %v220, %v223
        %vm225 = vweird.f32 %v119
        %vm226 = vweird.f32 %v220
        %vm227 = vmor %vm225, %vm226
        %v228 = vsel %vm227, %v220, %v224
        %v229 = vand.u32 2147483647, %v119
        %vm230 = vcmp.eq.f32.partialorder %v229, 8.507059e+37
        %v231 = vand.u32 %v119, 2147483648
        %v232 = vor.u32 1.1754944e-38, %v231
        %v233 = vsel %vm230, %v232, %v228
        %v234 = vmul.f32 %v219, %v233
        %vm235 = vweird.f32 %v119
        %v236 = vsel %vm235, %v219, %v234
        %237 = vst [vmem:[%s108] sm:$0xff] %v236
        %s238 = sand.u32 %s8, 1
        %s239 = sand.u32 %s8, 1
        %s240 = smul.addr %s239, 8
        %s241 = scalar_lea.vmem [#allocation1], %s240
        %s242 = sadd.s32 %s17, %s16
        %s243 = sadd.s32 %s242, %s15
        %s244 = sadd.s32 %s243, %s14
        %s245 = smul.addr %s244, 8
        %s246 = scalar_lea.vmem %s1, %s245
        // Predicated region
        $region55: #{custom-call.10} parent=53 // pred_check
          _
        $region56: #{custom-call.10} parent=53 // pred_check_branch
          %248 = sbr.rel (0) target = $region58
        $region57: #{custom-call.10} parent=53 // pred_region
          // Predicated region
          $region59: #{custom-call.10} parent=57 // pred_check
            _
          $region60: #{custom-call.10} parent=57 // pred_check_branch
            %250 = sbr.rel (0) target = $region62
          $region61: #{custom-call.10} parent=57 // pred_region
            // Predicated region
            $region74: #{custom-call.10} parent=61 // pred_check
              _
            $region75: #{custom-call.10} parent=61 // pred_check_branch
              %266 = sbr.rel (0) target = $region77
            $region76: #{custom-call.10} parent=61 // pred_region
              loop: start=0, step=1, limit=1
              $region78: #{custom-call.10} parent=76 // loop_pre_header
                _
              $region79: #{custom-call.10} parent=76 // loop_header
                %s268 = sphi 0, %s272
                %p269 = scmp.ge.s32.totalorder %s268, 1
                %s273 = sphi %s241, %s241
                %s274 = sphi %s246, %s246
              $region80: #{custom-call.10} parent=76 // loop_header_branch
                %271 = sbr.rel (%p269) target = $region84
              $region81: #{custom-call.10} parent=76 // loop_body
                %v275 = vld [vmem:[%s273] sm:$0xff]
                %276 = vst [vmem:[%s274] sm:$0xff] %v275
              $region82: #{custom-call.10} parent=76 // loop_footer
                %s272 = sadd.s32 1, %s268
              $region83: #{custom-call.10} parent=76 // loop_footer_branch
                %267 = sbr.rel target = $region79
              $region84: #{custom-call.10} parent=76 // loop_exit
                _
            $region77: #{custom-call.10} parent=61 // pred_fallthru
              _
            // Predicated region
            $region85: #{custom-call.10} parent=61 // pred_check
              _
            $region86: #{custom-call.10} parent=61 // pred_check_branch
              %278 = sbr.rel target = $region88
            $region87: #{custom-call.10} parent=61 // pred_region
              _
            $region88: #{custom-call.10} parent=61 // pred_fallthru
              _
          $region62: #{custom-call.10} parent=57 // pred_fallthru
            _
          // Predicated region
          $region63: #{custom-call.10} parent=57 // pred_check
            _
          $region64: #{custom-call.10} parent=57 // pred_check_branch
            %252 = sbr.rel target = $region66
          $region65: #{custom-call.10} parent=57 // pred_region
            %s254 = ssub.s32 256, 1
            loop: start=0, step=1, limit=1
            $region67: #{custom-call.10} parent=65 // loop_pre_header
              _
            $region68: #{custom-call.10} parent=65 // loop_header
              %s256 = sphi 0, %s260
              %p257 = scmp.ge.s32.totalorder %s256, 1
              %s261 = sphi %s241, %s241
              %s262 = sphi %s246, %s246
            $region69: #{custom-call.10} parent=65 // loop_header_branch
              %259 = sbr.rel (%p257) target = $region73
            $region70: #{custom-call.10} parent=65 // loop_body
              %v263 = vld [vmem:[%s261] sm:%s254]
              %264 = vst [vmem:[%s262] sm:%s254] %v263
            $region71: #{custom-call.10} parent=65 // loop_footer
              %s260 = sadd.s32 1, %s256
            $region72: #{custom-call.10} parent=65 // loop_footer_branch
              %255 = sbr.rel target = $region68
            $region73: #{custom-call.10} parent=65 // loop_exit
              _
          $region66: #{custom-call.10} parent=57 // pred_fallthru
            _
        $region58: #{custom-call.10} parent=53 // pred_fallthru
          _
        %279 = vnop
      $region54: #{custom-call.10} parent=5 // pred_fallthru
        _
      %p280 = scmp.le.s32.totalorder 2, %s3
      // Predicated region
      $region89: #{custom-call.10} parent=5 // pred_check
        %p281 = pneg %p280
      $region90: #{custom-call.10} parent=5 // pred_check_branch
        %283 = sbr.rel (%p281) target = $region92
      $region91: #{custom-call.10} parent=5 // pred_region
        %s284 = ssub.s32 %s3, 2
        %s285 = sand.u32 %s9, 1
        %s286 = sand.u32 %s9, 1
        %s287 = smul.addr %s286, 8
        %s288 = scalar_lea.vmem [#allocation1], %s287
      $region92: #{custom-call.10} parent=5 // pred_fallthru
        _
    $region6: #{custom-call.10} parent=1 // loop_footer
      %s7 = sadd.s32 1, %s3
    $region7: #{custom-call.10} parent=1 // loop_footer_branch
      %2 = sbr.rel target = $region3
    $region8: #{custom-call.10} parent=1 // loop_exit
      _

// kernel: gmm_loss.2
$region0: #{gmm_loss.2}
  #allocation0 [shape = 'u32[]', space=smem, size = 0x4, offset = 0x4, fixed_abs, tag = 'smem constant byte address 0x4 - core index']
  #allocation1 [shape = 'u32[72,128]{1,0:T(1,128)}', space=vmem, size = 0x9000, scoped, tag = 'internal scratch']
  %s0 = inlined_call_operand.vmem [shape: f32[8,64], index: 0, kind: input, shape index: {}]
  %s1 = inlined_call_operand.vmem [shape: f32[4,64], index: 1, kind: input, shape index: {}]
  %s2 = inlined_call_operand.vmem [shape: f32[8,1], index: 2, kind: input, shape index: {}]
  %s3 = inlined_call_operand.vmem [shape: f32[1,4,1], index: 3, kind: output, shape index: {0}]
  %s4 = inlined_call_operand.vmem [shape: f32[1,4,8], index: 4, kind: output, shape index: {1}]
  %s5 = inlined_call_operand.vmem [shape: f32[1,8,32], index: 5, kind: output, shape index: {2}]
  %6 = xla_tuple %s3, %s4, %s5
  %s7 = sld [smem:[#allocation0]]
  $region42: #{gmm_loss.2} parent=0
    _
  %s9 = ssub.s32 1, %s7
  %s10 = scalar_select 0, %s9, %s7
  // Predicated region
  $region2: #{gmm_loss.2} parent=0 // pred_check
    _
  $region3: #{gmm_loss.2} parent=0 // pred_check_branch
    %12 = sbr.rel (0) target = $region5
  $region4: #{gmm_loss.2} parent=0 // pred_region
    %s13 = sadd.s32 0, 0
    %p14 = scmp.lt.s32.totalorder %s13, 0
    %s15 = scalar_select %p14, %s13, 0
    %p16 = scmp.lt.s32.totalorder %s15, 0
    %s17 = scalar_select %p16, %s15, 0
    %s18 = smul.addr %s17, 8
    %s19 = scalar_lea.vmem %s0, %s18
    %s20 = sadd.s32 0, 0
    %p21 = scmp.lt.s32.totalorder %s20, 0
    %s22 = scalar_select %p21, %s20, 0
  $region5: #{gmm_loss.2} parent=0 // pred_fallthru
    _
  // Predicated region
  $region6: #{gmm_loss.2} parent=0 // pred_check
    _
  $region7: #{gmm_loss.2} parent=0 // pred_check_branch
    %24 = sbr.rel (0) target = $region9
  $region8: #{gmm_loss.2} parent=0 // pred_region
    %s25 = sadd.s32 0, 0
    %p26 = scmp.lt.s32.totalorder %s25, 0
    %s27 = scalar_select %p26, %s25, 0
    %p28 = scmp.lt.s32.totalorder %s27, 0
    %s29 = scalar_select %p28, %s27, 0
    %s30 = smul.addr %s29, 4
    %s31 = scalar_lea.vmem %s1, %s30
    %s32 = sadd.s32 0, 0
    %p33 = scmp.lt.s32.totalorder %s32, 0
    %s34 = scalar_select %p33, %s32, 0
  $region9: #{gmm_loss.2} parent=0 // pred_fallthru
    _
  // Predicated region
  $region10: #{gmm_loss.2} parent=0 // pred_check
    _
  $region11: #{gmm_loss.2} parent=0 // pred_check_branch
    %36 = sbr.rel (0) target = $region13
  $region12: #{gmm_loss.2} parent=0 // pred_region
    _
  $region13: #{gmm_loss.2} parent=0 // pred_fallthru
    _
  %s37 = sadd.s32 0, 0
  %p38 = scmp.lt.s32.totalorder %s37, 0
  %s39 = scalar_select %p38, %s37, 0
  %p40 = scmp.lt.s32.totalorder %s39, 0
  %s41 = scalar_select %p40, %s39, 0
  %s42 = smul.addr %s41, 8
  %s43 = scalar_lea.vmem %s0, %s42
  %s44 = sadd.s32 0, 0
  %p45 = scmp.lt.s32.totalorder %s44, 0
  %s46 = scalar_select %p45, %s44, 0
  %p47 = scmp.lt.s32.totalorder %s46, 0
  %s48 = scalar_select %p47, %s46, 0
  %s49 = smul.addr %s48, 4
  %s50 = scalar_lea.vmem %s1, %s49
  %s51 = sadd.s32 0, 0
  %p52 = scmp.lt.s32.totalorder %s51, 0
  %s53 = scalar_select %p52, %s51, 0
  %p54 = scmp.lt.s32.totalorder %s53, 0
  %s55 = scalar_select %p54, %s53, 0
  %s56 = smul.addr %s55, 8
  %s57 = scalar_lea.vmem %s0, %s56
  %s58 = sadd.s32 0, 0
  %p59 = scmp.lt.s32.totalorder %s58, 0
  %s60 = scalar_select %p59, %s58, 0
  %s61 = sadd.s32 0, 0
  %p62 = scmp.lt.s32.totalorder %s61, 0
  %s63 = scalar_select %p62, %s61, 0
  %p64 = scmp.lt.s32.totalorder %s63, 0
  %s65 = scalar_select %p64, %s63, 0
  %s66 = smul.addr %s65, 4
  %s67 = scalar_lea.vmem %s1, %s66
  %s68 = sadd.s32 0, 0
  %p69 = scmp.lt.s32.totalorder %s68, 0
  %s70 = scalar_select %p69, %s68, 0
  %p71 = scmp.eq.s32.totalorder 0, 0
  // Predicated region
  $region14: #{gmm_loss.2} parent=0 // pred_check
    %p72 = pneg %p71
  $region15: #{gmm_loss.2} parent=0 // pred_check_branch
    %74 = sbr.rel (%p72) target = $region17
  $region16: #{gmm_loss.2} parent=0 // pred_region
    %vm75 = vcmask 3072
    %76 = vst.msk [vmem:[%s3] sm:$0xf] %vm75, 0.0
    %vm77 = vcmask 60416
    %78 = vst.msk [vmem:[%s4] sm:$0xf] %vm77, 0.0
    %vm79 = vcmask 261120
    %80 = vst.msk [vmem:[%s5] sm:$0xff] %vm79, 0.0
  $region17: #{gmm_loss.2} parent=0 // pred_fallthru
    _
  %s81 = sadd.s32 0, 0
  %v82 = vlaneseq
  %v83 = vand.u32 %v82, 127
  %s84 = smul.u32 %s81, 128
  %v85 = vstv %s84
  %v86 = vadd.s32 %v85, %v83
  %vm87 = vcmp.lt.s32.totalorder %v86, 64
  %v88 = vld [vmem:[%s57] sm:$0xff]
  %v89 = vsel %vm87, 1, 0
  %vm90 = vcmp.eq.s32.totalorder %v89, 1
  %v91 = vsel %vm90, %v88, 0.0
  %v92 = vld [vmem:[%s2] sm:$0xff]
  %94 = vset.pattern.permute.xlu0 0
  %95 = vperm.xlu0 %94, %v92
  %v96 = vpop.permute.xlu0 %95
  %v98 = vsub.f32 %v91, %v96
  %v99 = vld [vmem:[%s67] sm:$0xf]
  %v100 = vsel %vm90, %v99, 0.0
  %vm101 = vcmask 1043456
  %v102 = vsel %vm101, %v100, 0.0
  %103 = vadd.xlane.f32.xlu0 %v102
  %v104 = vpop.xlane.xlu0 %103
  %105 = vmatpush.xpose.msra.mxu0 0.0
  %106 = vmatpush.xpose.msra.mxu0 0.0
  %107 = vmatpush.xpose.msra.mxu0 0.0
  %108 = vmatpush.xpose.msra.mxu0 0.0
  %109 = vmatpush.xpose.msra.mxu0 0.0
  %110 = vmatpush.xpose.msra.mxu0 0.0
  %111 = vmatpush.xpose.msra.mxu0 0.0
  %112 = vmatpush.xpose.msra.mxu0 0.0
  %113 = vmatpush.xpose.msra.mxu0 0.0
  %114 = vmatpush.xpose.msra.mxu0 0.0
  %115 = vmatpush.xpose.msra.mxu0 0.0
  %116 = vmatpush.xpose.msra.mxu0 0.0
  %117 = vmatpush.xpose.msra.mxu0 0.0
  %118 = vmatpush.xpose.msra.mxu0 0.0
  %119 = vmatpush.xpose.msra.mxu0 0.0
  %120 = vmatpush.xpose.msra.mxu0 %v98
  %121 = vmatmul.f32.gmra.mxu0 %v100
  %v122 = vpop.f32.mrf.mxu0
  %v123 = vadd.f32 0.0, %v122
  %124 = vdwg.mxu0
  %v126 = vrot.slane %v100, 1
  %v127 = vrot.slane %v100, 2
  %v128 = vrot.slane %v100, 3
  %v129 = vperm.slane %v100, 0
  %v130 = vperm.slane %v126, 0
  %v131 = vperm.slane %v127, 0
  %v132 = vperm.slane %v128, 0
  %v137 = vmul.f32 %v129, %v98
  %v138 = vmul.f32 %v130, %v98
  %v139 = vmul.f32 %v131, %v98
  %v140 = vmul.f32 %v132, %v98
  %141 = vmatpush.xpose.msra.mxu0 0.0
  %142 = vmatpush.xpose.msra.mxu0 0.0
  %143 = vmatpush.xpose.msra.mxu0 0.0
  %144 = vmatpush.xpose.msra.mxu0 0.0
  %145 = vmatpush.xpose.msra.mxu0 0.0
  %146 = vmatpush.xpose.msra.mxu0 0.0
  %147 = vmatpush.xpose.msra.mxu0 0.0
  %148 = vmatpush.xpose.msra.mxu0 0.0
  %149 = vmatpush.xpose.msra.mxu0 0.0
  %150 = vmatpush.xpose.msra.mxu0 0.0
  %151 = vmatpush.xpose.msra.mxu0 0.0
  %152 = vmatpush.xpose.msra.mxu0 0.0
  %153 = vmatpush.xpose.msra.mxu0 %v140
  %154 = vmatpush.xpose.msra.mxu0 %v139
  %155 = vmatpush.xpose.msra.mxu0 %v138
  %156 = vmatpush.xpose.msra.mxu0 %v137
  %157 = vmatmul.f32.gmra.mxu0 %v98
  %v158 = vpop.f32.mrf.mxu0
  %v159 = vadd.f32 0.0, %v158
  %160 = vdwg.mxu0
  %v161 = vld [vmem:[%s3] sm:$0xf]
  %v162 = vadd.f32 %v161, %v104
  %vm163 = vcmask 3072
  %164 = vst.msk [vmem:[%s3] sm:$0xf] %vm163, %v162
  %v165 = vld [vmem:[%s4] sm:$0xf]
  %v166 = vadd.f32 %v165, %v123
  %vm167 = vcmask 60416
  %168 = vst.msk [vmem:[%s4] sm:$0xf] %vm167, %v166
  %v169 = vld [vmem:[%s5] sm:$0xff]
  %v170 = vadd.f32 %v169, %v159
  %vm171 = vcmask 261120
  %172 = vst.msk [vmem:[%s5] sm:$0xff] %vm171, %v170
  // Predicated region
  $region18: #{gmm_loss.2} parent=0 // pred_check
    _
  $region19: #{gmm_loss.2} parent=0 // pred_check_branch
    %174 = sbr.rel (0) target = $region21
  $region20: #{gmm_loss.2} parent=0 // pred_region
    _
  $region21: #{gmm_loss.2} parent=0 // pred_fallthru
    _
  // Predicated region
  $region22: #{gmm_loss.2} parent=0 // pred_check
    _
  $region23: #{gmm_loss.2} parent=0 // pred_check_branch
    %176 = sbr.rel (0) target = $region25
  $region24: #{gmm_loss.2} parent=0 // pred_region
    _
  $region25: #{gmm_loss.2} parent=0 // pred_fallthru
    _
  // Predicated region
  $region26: #{gmm_loss.2} parent=0 // pred_check
    _
  $region27: #{gmm_loss.2} parent=0 // pred_check_branch
    %178 = sbr.rel (0) target = $region29
  $region28: #{gmm_loss.2} parent=0 // pred_region
    _
  $region29: #{gmm_loss.2} parent=0 // pred_fallthru
    _
  // Predicated region
  $region30: #{gmm_loss.2} parent=0 // pred_check
    _
  $region31: #{gmm_loss.2} parent=0 // pred_check_branch
    %180 = sbr.rel (0) target = $region33
  $region32: #{gmm_loss.2} parent=0 // pred_region
    _
  $region33: #{gmm_loss.2} parent=0 // pred_fallthru
    _
  // Predicated region
  $region34: #{gmm_loss.2} parent=0 // pred_check
    _
  $region35: #{gmm_loss.2} parent=0 // pred_check_branch
    %182 = sbr.rel (0) target = $region37
  $region36: #{gmm_loss.2} parent=0 // pred_region
    _
  $region37: #{gmm_loss.2} parent=0 // pred_fallthru
    _
  // Predicated region
  $region38: #{gmm_loss.2} parent=0 // pred_check
    _
  $region39: #{gmm_loss.2} parent=0 // pred_check_branch
    %184 = sbr.rel (0) target = $region41
  $region40: #{gmm_loss.2} parent=0 // pred_region
    _
  $region41: #{gmm_loss.2} parent=0 // pred_fallthru
    _

// kernel: custom-call.9
$region0: #{custom-call.9}
  %s0 = inlined_call_operand.vmem [shape: f32[4,1,8,8], index: 0, kind: input, shape index: {}]
  %s1 = inlined_call_operand.vmem [shape: f32[4,1,8,8], index: 1, kind: output, shape index: {}]
  $region1: #{custom-call.9} parent=0
    #allocation0 [shape = 'u8[8192]{0}', space=vmem, size = 0x2000, scoped, tag = 'operand span for operand 0']
    #allocation1 [shape = 'u8[8192]{0}', space=vmem, size = 0x2000, scoped, tag = 'operand span for operand 1']
    loop: start=0, step=1, limit=6
    $region2: #{custom-call.9} parent=1 // loop_pre_header
      _
    $region3: #{custom-call.9} parent=1 // loop_header
      %s3 = sphi 0, %s7
      %p4 = scmp.ge.s32.totalorder %s3, 6
      %s10 = sphi 0, %s36
      %s11 = sphi 0, %s32
      %s12 = sphi 0, %s28
      %s13 = sphi 0, %s24
      %s14 = sphi 0, %s10
      %s15 = sphi 0, %s11
      %s16 = sphi 0, %s12
      %s17 = sphi 0, %s13
      %s18 = sphi 0, %s14
      %s19 = sphi 0, %s15
      %s20 = sphi 0, %s16
      %s21 = sphi 0, %s17
    $region4: #{custom-call.9} parent=1 // loop_header_branch
      %6 = sbr.rel (%p4) target = $region8
    $region5: #{custom-call.9} parent=1 // loop_body
      %s8 = ssub.s32 %s3, 1
      %s9 = ssub.s32 %s3, 2
      %s22 = sadd.s32 1, %s13
      %p23 = scmp.ge.s32.totalorder %s22, 1
      %s24 = scalar_select %p23, 0, %s22
      %s25 = sadd.s32 1, %s12
      %s26 = scalar_select %p23, %s25, %s12
      %p27 = scmp.ge.s32.totalorder %s26, 1
      %s28 = scalar_select %p27, 0, %s26
      %s29 = sadd.s32 1, %s11
      %s30 = scalar_select %p27, %s29, %s11
      %p31 = scmp.ge.s32.totalorder %s30, 1
      %s32 = scalar_select %p31, 0, %s30
      %s33 = sadd.s32 1, %s10
      %s34 = scalar_select %p31, %s33, %s10
      %p35 = scmp.ge.s32.totalorder %s34, 4
      %s36 = scalar_select %p35, 0, %s34
      %p37 = scmp.le.s32.totalorder 1, %s3
      %p38 = scmp.lt.s32.totalorder %s3, 5
      %p39 = pnand %p37, %p38
      %p40 = pneg %p39
      // Predicated region
      $region9: #{custom-call.9} parent=5 // pred_check
        _
      $region10: #{custom-call.9} parent=5 // pred_check_branch
        %42 = sbr.rel (%p39) target = $region12
      $region11: #{custom-call.9} parent=5 // pred_region
        %s43 = ssub.s32 %s3, 1
      $region12: #{custom-call.9} parent=5 // pred_fallthru
        _
      %p44 = scmp.lt.s32.totalorder %s3, 4
      // Predicated region
      $region13: #{custom-call.9} parent=5 // pred_check
        %p45 = pneg %p44
      $region14: #{custom-call.9} parent=5 // pred_check_branch
        %47 = sbr.rel (%p45) target = $region16
      $region15: #{custom-call.9} parent=5 // pred_region
        %s48 = sand.u32 %s3, 1
        %s49 = sand.u32 %s3, 1
        %s50 = smul.addr %s49, 8
        %s51 = scalar_lea.vmem [#allocation0], %s50
        %s52 = sadd.s32 %s13, %s12
        %s53 = sadd.s32 %s52, %s11
        %s54 = sadd.s32 %s53, %s10
        %s55 = smul.addr %s54, 8
        %s56 = scalar_lea.vmem %s0, %s55
        // Predicated region
        $region17: #{custom-call.9} parent=15 // pred_check
          _
        $region18: #{custom-call.9} parent=15 // pred_check_branch
          %58 = sbr.rel (0) target = $region20
        $region19: #{custom-call.9} parent=15 // pred_region
          // Predicated region
          $region21: #{custom-call.9} parent=19 // pred_check
            _
          $region22: #{custom-call.9} parent=19 // pred_check_branch
            %60 = sbr.rel (0) target = $region24
          $region23: #{custom-call.9} parent=19 // pred_region
            // Predicated region
            $region36: #{custom-call.9} parent=23 // pred_check
              _
            $region37: #{custom-call.9} parent=23 // pred_check_branch
              %76 = sbr.rel (0) target = $region39
            $region38: #{custom-call.9} parent=23 // pred_region
              loop: start=0, step=1, limit=1
              $region40: #{custom-call.9} parent=38 // loop_pre_header
                _
              $region41: #{custom-call.9} parent=38 // loop_header
                %s78 = sphi 0, %s82
                %p79 = scmp.ge.s32.totalorder %s78, 1
                %s83 = sphi %s56, %s56
                %s84 = sphi %s51, %s51
              $region42: #{custom-call.9} parent=38 // loop_header_branch
                %81 = sbr.rel (%p79) target = $region46
              $region43: #{custom-call.9} parent=38 // loop_body
                %v85 = vld [vmem:[%s83] sm:$0xff]
                %86 = vst [vmem:[%s84] sm:$0xff] %v85
              $region44: #{custom-call.9} parent=38 // loop_footer
                %s82 = sadd.s32 1, %s78
              $region45: #{custom-call.9} parent=38 // loop_footer_branch
                %77 = sbr.rel target = $region41
              $region46: #{custom-call.9} parent=38 // loop_exit
                _
            $region39: #{custom-call.9} parent=23 // pred_fallthru
              _
            // Predicated region
            $region47: #{custom-call.9} parent=23 // pred_check
              _
            $region48: #{custom-call.9} parent=23 // pred_check_branch
              %88 = sbr.rel target = $region50
            $region49: #{custom-call.9} parent=23 // pred_region
              _
            $region50: #{custom-call.9} parent=23 // pred_fallthru
              _
          $region24: #{custom-call.9} parent=19 // pred_fallthru
            _
          // Predicated region
          $region25: #{custom-call.9} parent=19 // pred_check
            _
          $region26: #{custom-call.9} parent=19 // pred_check_branch
            %62 = sbr.rel target = $region28
          $region27: #{custom-call.9} parent=19 // pred_region
            %s64 = ssub.s32 256, 1
            loop: start=0, step=1, limit=1
            $region29: #{custom-call.9} parent=27 // loop_pre_header
              _
            $region30: #{custom-call.9} parent=27 // loop_header
              %s66 = sphi 0, %s70
              %p67 = scmp.ge.s32.totalorder %s66, 1
              %s71 = sphi %s56, %s56
              %s72 = sphi %s51, %s51
            $region31: #{custom-call.9} parent=27 // loop_header_branch
              %69 = sbr.rel (%p67) target = $region35
            $region32: #{custom-call.9} parent=27 // loop_body
              %v73 = vld [vmem:[%s71] sm:%s64]
              %74 = vst [vmem:[%s72] sm:%s64] %v73
            $region33: #{custom-call.9} parent=27 // loop_footer
              %s70 = sadd.s32 1, %s66
            $region34: #{custom-call.9} parent=27 // loop_footer_branch
              %65 = sbr.rel target = $region30
            $region35: #{custom-call.9} parent=27 // loop_exit
              _
          $region28: #{custom-call.9} parent=19 // pred_fallthru
            _
        $region20: #{custom-call.9} parent=15 // pred_fallthru
          _
        %89 = vnop
      $region16: #{custom-call.9} parent=5 // pred_fallthru
        _
      %p90 = scmp.le.s32.totalorder 1, %s3
      %p91 = scmp.lt.s32.totalorder %s3, 5
      %p92 = pnand %p90, %p91
      %p93 = pneg %p92
      // Predicated region
      $region51: #{custom-call.9} parent=5 // pred_check
        _
      $region52: #{custom-call.9} parent=5 // pred_check_branch
        %95 = sbr.rel (%p92) target = $region54
      $region53: #{custom-call.9} parent=5 // pred_region
        #allocation2 [shape = 'f32[8,8]{1,0}', space=vmem, size = 0x1000, scoped, tag = 'rescaled input a']
        %s96 = ssub.s32 %s3, 1
        %s97 = sand.u32 %s8, 1
        %s98 = sand.u32 %s8, 1
        %s99 = smul.addr %s98, 8
        %s100 = scalar_lea.vmem [#allocation0], %s99
        %s101 = sand.u32 %s8, 1
        %s102 = sand.u32 %s8, 1
        %s103 = smul.addr %s102, 8
        %s104 = scalar_lea.vmem [#allocation0], %s103
        %s105 = sand.u32 %s8, 1
        %s106 = sand.u32 %s8, 1
        %s107 = smul.addr %s106, 8
        %s108 = scalar_lea.vmem [#allocation1], %s107
        %v109 = vlaneseq
        %v110 = vand.u32 %v109, 127
        %vm111 = vcmp.lt.s32.totalorder %v110, 8
        %v112 = vlaneseq
        %v113 = vshrl.u32 %v112, 7
        %vm115 = vcmp.eq.s32.totalorder %v113, %v110
        %v116 = vld [vmem:[%s100] sm:$0xff]
        %v117 = vsel %vm115, %v116, 0.0
        %118 = vadd.xlane.f32.xlu0 %v117
        %v119 = vpop.xlane.xlu0 %118
        %vm120 = vcmp.le.s32.totalorder %v113, %v110
        %vm121 = vmand %vm120, %vm111
        %v122 = vsel %vm121, %v116, 0.0
        %v123 = vrcp.pop %v119
        %v124 = vmul.f32 %v119, %v123
        %v125 = vsub.f32 1.0, %v124
        %v126 = vmul.f32 %v123, %v125
        %v127 = vadd.f32 %v123, %v126
        %vm128 = vweird.f32 %v119
        %vm129 = vweird.f32 %v123
        %vm130 = vmor %vm128, %vm129
        %v131 = vsel %vm130, %v123, %v127
        %v132 = vand.u32 2147483647, %v119
        %vm133 = vcmp.eq.f32.partialorder %v132, 8.507059e+37
        %v134 = vand.u32 %v119, 2147483648
        %v135 = vor.u32 1.1754944e-38, %v134
        %v136 = vsel %vm133, %v135, %v131
        %v137 = vmul.f32 %v122, %v136
        %138 = vst [vmem:[#allocation2] sm:$0xff] %v137
        %v139 = vlaneseq
        %v140 = vand.u32 %v139, 127
        %v141 = vlaneseq
        %v142 = vshrl.u32 %v141, 7
        %vm144 = vcmp.eq.s32.totalorder %v140, %v142
        %v145 = vlaneseq
        %v146 = vand.u32 %v145, 127
        %vm147 = vcmp.eq.s32.totalorder %v146, 7
        %v148 = vsel %vm147, 1.0, -1.0
        %v149 = vsel %vm144, %v148, 0.0
        %s150 = scalar_lea.vmem [#allocation2], 6
        %v151 = vld [vmem:[%s150] ss:$0 sm:$0xff]
        %v152 = vxor.u32 %v151, 2147483648
        %v153 = vlaneseq
        %v154 = vand.u32 %v153, 127
        %vm155 = vcmp.eq.s32.totalorder %v154, 6
        %v156 = vmul.f32 %v152, %v149
        %157 = vadd.xlane.f32.xlu0 %v156
        %v158 = vpop.xlane.xlu0 %157
        %v159 = vsel %vm155, %v158, %v149
        %s160 = scalar_lea.vmem [#allocation2], 5
        %v161 = vld [vmem:[%s160] ss:$0 sm:$0xff]
        %v162 = vxor.u32 %v161, 2147483648
        %v163 = vlaneseq
        %v164 = vand.u32 %v163, 127
        %vm165 = vcmp.eq.s32.totalorder %v164, 5
        %v166 = vmul.f32 %v162, %v159
        %167 = vadd.xlane.f32.xlu0 %v166
        %v168 = vpop.xlane.xlu0 %167
        %v169 = vsel %vm165, %v168, %v159
        %s170 = scalar_lea.vmem [#allocation2], 4
        %v171 = vld [vmem:[%s170] ss:$0 sm:$0xff]
        %v172 = vxor.u32 %v171, 2147483648
        %v173 = vlaneseq
        %v174 = vand.u32 %v173, 127
        %vm175 = vcmp.eq.s32.totalorder %v174, 4
        %v176 = vmul.f32 %v172, %v169
        %177 = vadd.xlane.f32.xlu0 %v176
        %v178 = vpop.xlane.xlu0 %177
        %v179 = vsel %vm175, %v178, %v169
        %s180 = scalar_lea.vmem [#allocation2], 3
        %v181 = vld [vmem:[%s180] ss:$0 sm:$0xff]
        %v182 = vxor.u32 %v181, 2147483648
        %v183 = vlaneseq
        %v184 = vand.u32 %v183, 127
        %vm185 = vcmp.eq.s32.totalorder %v184, 3
        %v186 = vmul.f32 %v182, %v179
        %187 = vadd.xlane.f32.xlu0 %v186
        %v188 = vpop.xlane.xlu0 %187
        %v189 = vsel %vm185, %v188, %v179
        %s190 = scalar_lea.vmem [#allocation2], 2
        %v191 = vld [vmem:[%s190] ss:$0 sm:$0xff]
        %v192 = vxor.u32 %v191, 2147483648
        %v193 = vlaneseq
        %v194 = vand.u32 %v193, 127
        %vm195 = vcmp.eq.s32.totalorder %v194, 2
        %v196 = vmul.f32 %v192, %v189
        %197 = vadd.xlane.f32.xlu0 %v196
        %v198 = vpop.xlane.xlu0 %197
        %v199 = vsel %vm195, %v198, %v189
        %s200 = scalar_lea.vmem [#allocation2], 1
        %v201 = vld [vmem:[%s200] ss:$0 sm:$0xff]
        %v202 = vxor.u32 %v201, 2147483648
        %v203 = vlaneseq
        %v204 = vand.u32 %v203, 127
        %vm205 = vcmp.eq.s32.totalorder %v204, 1
        %v206 = vmul.f32 %v202, %v199
        %207 = vadd.xlane.f32.xlu0 %v206
        %v208 = vpop.xlane.xlu0 %207
        %v209 = vsel %vm205, %v208, %v199
        %v210 = vld [vmem:[#allocation2] ss:$0 sm:$0xff]
        %v211 = vxor.u32 %v210, 2147483648
        %v212 = vlaneseq
        %v213 = vand.u32 %v212, 127
        %vm214 = vcmp.eq.s32.totalorder %v213, 0
        %v215 = vmul.f32 %v211, %v209
        %216 = vadd.xlane.f32.xlu0 %v215
        %v217 = vpop.xlane.xlu0 %216
        %v218 = vsel %vm214, %v217, %v209
        %v219 = vrcp.pop %v119
        %v220 = vmul.f32 %v119, %v219
        %v221 = vsub.f32 1.0, %v220
        %v222 = vmul.f32 %v219, %v221
        %v223 = vadd.f32 %v219, %v222
        %vm224 = vweird.f32 %v119
        %vm225 = vweird.f32 %v219
        %vm226 = vmor %vm224, %vm225
        %v227 = vsel %vm226, %v219, %v223
        %v228 = vand.u32 2147483647, %v119
        %vm229 = vcmp.eq.f32.partialorder %v228, 8.507059e+37
        %v230 = vand.u32 %v119, 2147483648
        %v231 = vor.u32 1.1754944e-38, %v230
        %v232 = vsel %vm229, %v231, %v227
        %v233 = vmul.f32 %v218, %v232
        %vm234 = vweird.f32 %v119
        %v235 = vsel %vm234, %v218, %v233
        %236 = vst [vmem:[%s108] sm:$0xff] %v235
        %s237 = sand.u32 %s8, 1
        %s238 = sand.u32 %s8, 1
        %s239 = smul.addr %s238, 8
        %s240 = scalar_lea.vmem [#allocation1], %s239
        %s241 = sadd.s32 %s17, %s16
        %s242 = sadd.s32 %s241, %s15
        %s243 = sadd.s32 %s242, %s14
        %s244 = smul.addr %s243, 8
        %s245 = scalar_lea.vmem %s1, %s244
        // Predicated region
        $region55: #{custom-call.9} parent=53 // pred_check
          _
        $region56: #{custom-call.9} parent=53 // pred_check_branch
          %247 = sbr.rel (0) target = $region58
        $region57: #{custom-call.9} parent=53 // pred_region
          // Predicated region
          $region59: #{custom-call.9} parent=57 // pred_check
            _
          $region60: #{custom-call.9} parent=57 // pred_check_branch
            %249 = sbr.rel (0) target = $region62
          $region61: #{custom-call.9} parent=57 // pred_region
            // Predicated region
            $region74: #{custom-call.9} parent=61 // pred_check
              _
            $region75: #{custom-call.9} parent=61 // pred_check_branch
              %265 = sbr.rel (0) target = $region77
            $region76: #{custom-call.9} parent=61 // pred_region
              loop: start=0, step=1, limit=1
              $region78: #{custom-call.9} parent=76 // loop_pre_header
                _
              $region79: #{custom-call.9} parent=76 // loop_header
                %s267 = sphi 0, %s271
                %p268 = scmp.ge.s32.totalorder %s267, 1
                %s272 = sphi %s240, %s240
                %s273 = sphi %s245, %s245
              $region80: #{custom-call.9} parent=76 // loop_header_branch
                %270 = sbr.rel (%p268) target = $region84
              $region81: #{custom-call.9} parent=76 // loop_body
                %v274 = vld [vmem:[%s272] sm:$0xff]
                %275 = vst [vmem:[%s273] sm:$0xff] %v274
              $region82: #{custom-call.9} parent=76 // loop_footer
                %s271 = sadd.s32 1, %s267
              $region83: #{custom-call.9} parent=76 // loop_footer_branch
                %266 = sbr.rel target = $region79
              $region84: #{custom-call.9} parent=76 // loop_exit
                _
            $region77: #{custom-call.9} parent=61 // pred_fallthru
              _
            // Predicated region
            $region85: #{custom-call.9} parent=61 // pred_check
              _
            $region86: #{custom-call.9} parent=61 // pred_check_branch
              %277 = sbr.rel target = $region88
            $region87: #{custom-call.9} parent=61 // pred_region
              _
            $region88: #{custom-call.9} parent=61 // pred_fallthru
              _
          $region62: #{custom-call.9} parent=57 // pred_fallthru
            _
          // Predicated region
          $region63: #{custom-call.9} parent=57 // pred_check
            _
          $region64: #{custom-call.9} parent=57 // pred_check_branch
            %251 = sbr.rel target = $region66
          $region65: #{custom-call.9} parent=57 // pred_region
            %s253 = ssub.s32 256, 1
            loop: start=0, step=1, limit=1
            $region67: #{custom-call.9} parent=65 // loop_pre_header
              _
            $region68: #{custom-call.9} parent=65 // loop_header
              %s255 = sphi 0, %s259
              %p256 = scmp.ge.s32.totalorder %s255, 1
              %s260 = sphi %s240, %s240
              %s261 = sphi %s245, %s245
            $region69: #{custom-call.9} parent=65 // loop_header_branch
              %258 = sbr.rel (%p256) target = $region73
            $region70: #{custom-call.9} parent=65 // loop_body
              %v262 = vld [vmem:[%s260] sm:%s253]
              %263 = vst [vmem:[%s261] sm:%s253] %v262
            $region71: #{custom-call.9} parent=65 // loop_footer
              %s259 = sadd.s32 1, %s255
            $region72: #{custom-call.9} parent=65 // loop_footer_branch
              %254 = sbr.rel target = $region68
            $region73: #{custom-call.9} parent=65 // loop_exit
              _
          $region66: #{custom-call.9} parent=57 // pred_fallthru
            _
        $region58: #{custom-call.9} parent=53 // pred_fallthru
          _
        %278 = vnop
      $region54: #{custom-call.9} parent=5 // pred_fallthru
        _
      %p279 = scmp.le.s32.totalorder 2, %s3
      // Predicated region
      $region89: #{custom-call.9} parent=5 // pred_check
        %p280 = pneg %p279
      $region90: #{custom-call.9} parent=5 // pred_check_branch
        %282 = sbr.rel (%p280) target = $region92
      $region91: #{custom-call.9} parent=5 // pred_region
        %s283 = ssub.s32 %s3, 2
        %s284 = sand.u32 %s9, 1
        %s285 = sand.u32 %s9, 1
        %s286 = smul.addr %s285, 8
        %s287 = scalar_lea.vmem [#allocation1], %s286
      $region92: #{custom-call.9} parent=5 // pred_fallthru
        _
    $region6: #{custom-call.9} parent=1 // loop_footer
      %s7 = sadd.s32 1, %s3
    $region7: #{custom-call.9} parent=1 // loop_footer_branch
      %2 = sbr.rel target = $region3
    $region8: #{custom-call.9} parent=1 // loop_exit
      _

// kernel: gmm_loss.3
$region0: #{gmm_loss.3}
  #allocation0 [shape = 'u32[]', space=smem, size = 0x4, offset = 0x4, fixed_abs, tag = 'smem constant byte address 0x4 - core index']
  #allocation1 [shape = 'u32[72,128]{1,0:T(1,128)}', space=vmem, size = 0x9000, scoped, tag = 'internal scratch']
  %s0 = inlined_call_operand.vmem [shape: f32[8,64], index: 0, kind: input, shape index: {}]
  %s1 = inlined_call_operand.vmem [shape: f32[40,8], index: 1, kind: input, shape index: {}]
  %s2 = inlined_call_operand.vmem [shape: f32[4,1], index: 2, kind: input, shape index: {}]
  %s3 = inlined_call_operand.vmem [shape: f32[4,1], index: 3, kind: input, shape index: {}]
  %s4 = inlined_call_operand.hbm [shape: f32[1,1,1], index: 4, kind: output, shape index: {}]
  %s5 = sld [smem:[#allocation0]]
  $region30: #{gmm_loss.3} parent=0
    _
  %s7 = ssub.s32 1, %s5
  %s8 = scalar_select 0, %s7, %s5
  $region1: #{gmm_loss.3} parent=0
    #allocation2 [shape = 'u8[512]{0}', space=vmem, size = 0x400, scoped, tag = 'output window, operand 0, single buffered']
    #allocation3 [shape = 's32[1]{0}', space=sflag, size = 0x4, scoped, tag = 'scoped memory for gmm_loss.3']
    %9 = vsyncpa [#allocation3], 0
    // Predicated region
    $region2: #{gmm_loss.3} parent=1 // pred_check
      _
    $region3: #{gmm_loss.3} parent=1 // pred_check_branch
      %11 = sbr.rel (0) target = $region5
    $region4: #{gmm_loss.3} parent=1 // pred_region
      %s12 = sadd.s32 0, 0
      %p13 = scmp.lt.s32.totalorder %s12, 0
      %s14 = scalar_select %p13, %s12, 0
      %p15 = scmp.lt.s32.totalorder %s14, 0
      %s16 = scalar_select %p15, %s14, 0
      %s17 = smul.addr %s16, 8
      %s18 = scalar_lea.vmem %s0, %s17
      %s19 = sadd.s32 0, 0
      %p20 = scmp.lt.s32.totalorder %s19, 0
      %s21 = scalar_select %p20, %s19, 0
    $region5: #{gmm_loss.3} parent=1 // pred_fallthru
      _
    // Predicated region
    $region6: #{gmm_loss.3} parent=1 // pred_check
      _
    $region7: #{gmm_loss.3} parent=1 // pred_check_branch
      %23 = sbr.rel (0) target = $region9
    $region8: #{gmm_loss.3} parent=1 // pred_region
      _
    $region9: #{gmm_loss.3} parent=1 // pred_fallthru
      _
    // Predicated region
    $region10: #{gmm_loss.3} parent=1 // pred_check
      _
    $region11: #{gmm_loss.3} parent=1 // pred_check_branch
      %25 = sbr.rel (0) target = $region13
    $region12: #{gmm_loss.3} parent=1 // pred_region
      _
    $region13: #{gmm_loss.3} parent=1 // pred_fallthru
      _
    // Predicated region
    $region14: #{gmm_loss.3} parent=1 // pred_check
      _
    $region15: #{gmm_loss.3} parent=1 // pred_check_branch
      %27 = sbr.rel (0) target = $region17
    $region16: #{gmm_loss.3} parent=1 // pred_region
      _
    $region17: #{gmm_loss.3} parent=1 // pred_fallthru
      _
    %s28 = sadd.s32 0, 0
    %p29 = scmp.lt.s32.totalorder %s28, 0
    %s30 = scalar_select %p29, %s28, 0
    %p31 = scmp.lt.s32.totalorder %s30, 0
    %s32 = scalar_select %p31, %s30, 0
    %s33 = smul.addr %s32, 8
    %s34 = scalar_lea.vmem %s0, %s33
    %s35 = sadd.s32 0, 0
    %p36 = scmp.lt.s32.totalorder %s35, 0
    %s37 = scalar_select %p36, %s35, 0
    %p38 = scmp.lt.s32.totalorder %s37, 0
    %s39 = scalar_select %p38, %s37, 0
    %s40 = smul.addr %s39, 8
    %s41 = scalar_lea.vmem %s0, %s40
    %s42 = sadd.s32 0, 0
    %p43 = scmp.lt.s32.totalorder %s42, 0
    %s44 = scalar_select %p43, %s42, 0
    %p45 = scmp.eq.s32.totalorder 0, 0
    // Predicated region
    $region18: #{gmm_loss.3} parent=1 // pred_check
      %p46 = pneg %p45
    $region19: #{gmm_loss.3} parent=1 // pred_check_branch
      %48 = sbr.rel (%p46) target = $region21
    $region20: #{gmm_loss.3} parent=1 // pred_region
      %vm49 = vcmask 0
      %50 = vst.msk [vmem:[#allocation2] sm:$0x1] %vm49, 0.0
    $region21: #{gmm_loss.3} parent=1 // pred_fallthru
      _
    %s51 = sadd.s32 0, 0
    %v52 = vlaneseq
    %v53 = vand.u32 %v52, 127
    %s54 = smul.u32 %s51, 128
    %v55 = vstv %s54
    %v56 = vadd.s32 %v55, %v53
    %vm57 = vcmp.lt.s32.totalorder %v56, 64
    %v58 = vld [vmem:[%s41] sm:$0xff]
    %v59 = vsel %vm57, 1, 0
    %vm60 = vcmp.eq.s32.totalorder %v59, 1
    %v61 = vsel %vm60, %v58, 0.0
    %v62 = vld [vmem:[%s1] sm:$0xff]
    %v63 = vld [vmem:[%s1 + $0x8] sm:$0xff]
    %v64 = vld [vmem:[%s1 + $0x10] sm:$0xff]
    %v65 = vld [vmem:[%s1 + $0x18] sm:$0xff]
    %v66 = vld [vmem:[%s1 + $0x20] sm:$0xff]
    %vm67 = vcmask 64512
    %v69 = vsel %vm67, %v62, 0
    %v72 = vsel %vm67, %v63, 0
    %v75 = vsel %vm67, %v64, 0
    %v78 = vsel %vm67, %v65, 0
    %v81 = vsel %vm67, %v66, 0
    %83 = vmatpush.msra.mxu0 0.0
    %84 = vmatpush.msra.mxu0 0.0
    %85 = vmatpush.msra.mxu0 0.0
    %86 = vmatpush.msra.mxu0 0.0
    %87 = vmatpush.msra.mxu0 0.0
    %88 = vmatpush.msra.mxu0 0.0
    %89 = vmatpush.msra.mxu0 0.0
    %90 = vmatpush.msra.mxu0 0.0
    %91 = vmatpush.msra.mxu0 0.0
    %92 = vmatpush.msra.mxu0 0.0
    %93 = vmatpush.msra.mxu0 0.0
    %94 = vmatpush.msra.mxu0 0.0
    %95 = vmatpush.msra.mxu0 0.0
    %96 = vmatpush.msra.mxu0 0.0
    %97 = vmatpush.msra.mxu0 0.0
    %98 = vmatpush.msra.mxu0 %v61
    %99 = vmatmul.f32.gmra.mxu0 %v69
    %v100 = vpop.f32.mrf.mxu0
    %v101 = vadd.f32 0.0, %v100
    %102 = vmatmul.f32.gmra.mxu0 %v72
    %v103 = vpop.f32.mrf.mxu0
    %v104 = vadd.f32 0.0, %v103
    %105 = vmatmul.f32.gmra.mxu0 %v75
    %v106 = vpop.f32.mrf.mxu0
    %v107 = vadd.f32 0.0, %v106
    %108 = vmatmul.f32.gmra.mxu0 %v78
    %v109 = vpop.f32.mrf.mxu0
    %v110 = vadd.f32 0.0, %v109
    %111 = vmatmul.f32.gmra.mxu0 %v81
    %v112 = vpop.f32.mrf.mxu0
    %v113 = vadd.f32 0.0, %v112
    %114 = vdwg.mxu0
    %v115 = vmul.f32 %v101, %v61
    %v116 = vmul.f32 %v104, %v61
    %v117 = vmul.f32 %v107, %v61
    %v118 = vmul.f32 %v110, %v61
    %v119 = vrot.slane %v115, 4
    %v120 = vadd.f32 %v115, %v119
    %v121 = vrot.slane %v120, 2
    %v122 = vadd.f32 %v120, %v121
    %v123 = vrot.slane %v122, 1
    %v124 = vadd.f32 %v122, %v123
    %v125 = vrot.slane %v116, 4
    %v126 = vadd.f32 %v116, %v125
    %v127 = vrot.slane %v126, 2
    %v128 = vadd.f32 %v126, %v127
    %v129 = vrot.slane %v128, 1
    %v130 = vadd.f32 %v128, %v129
    %v131 = vrot.slane %v117, 4
    %v132 = vadd.f32 %v117, %v131
    %v133 = vrot.slane %v132, 2
    %v134 = vadd.f32 %v132, %v133
    %v135 = vrot.slane %v134, 1
    %v136 = vadd.f32 %v134, %v135
    %v137 = vrot.slane %v118, 4
    %v138 = vadd.f32 %v118, %v137
    %v139 = vrot.slane %v138, 2
    %v140 = vadd.f32 %v138, %v139
    %v141 = vrot.slane %v140, 1
    %v142 = vadd.f32 %v140, %v141
    %v143 = vmul.f32 %v113, 2.0
    %v145 = vrot.slane %v143, 1
    %v146 = vrot.slane %v143, 2
    %v147 = vrot.slane %v143, 3
    %v152 = vsub.f32 %v124, %v143
    %v153 = vsub.f32 %v130, %v145
    %v154 = vsub.f32 %v136, %v146
    %v155 = vsub.f32 %v142, %v147
    %v156 = vld [vmem:[%s3] sm:$0xf]
    %158 = vset.pattern.permute.xlu0 0
    %159 = vperm.xlu0 %158, %v156
    %v160 = vpop.permute.xlu0 %159
    %v161 = vrot.slane %v160, 1
    %v162 = vrot.slane %v160, 2
    %v163 = vrot.slane %v160, 3
    %v168 = vadd.f32 %v152, %v160
    %v169 = vadd.f32 %v153, %v161
    %v170 = vadd.f32 %v154, %v162
    %v171 = vadd.f32 %v155, %v163
    %v172 = vld [vmem:[%s2] sm:$0xf]
    %v173 = vmul.f32 %v168, -0.5
    %v174 = vmul.f32 %v169, -0.5
    %v175 = vmul.f32 %v170, -0.5
    %v176 = vmul.f32 %v171, -0.5
    %v177 = vmul.f32 %v173, 1.442695
    %v178 = vpow.pop %v177
    %v179 = vmul.f32 %v174, 1.442695
    %v180 = vpow.pop %v179
    %v181 = vmul.f32 %v175, 1.442695
    %v182 = vpow.pop %v181
    %v183 = vmul.f32 %v176, 1.442695
    %v184 = vpow.pop %v183
    %186 = vset.pattern.permute.xlu0 0
    %187 = vperm.xlu0 %186, %v172
    %v188 = vpop.permute.xlu0 %187
    %v194 = vrot.slane %v180, 7
    %vm195 = vcmask 1041409
    %v196 = vsel %vm195, %v194, %v178
    %v197 = vrot.slane %v182, 6
    %vm198 = vcmask 1042434
    %v199 = vsel %vm198, %v197, %v196
    %v200 = vrot.slane %v184, 5
    %vm201 = vcmask 1043459
    %v202 = vsel %vm201, %v200, %v199
    %v204 = vmul.f32 %v188, %v202
    %vm205 = vcmask 1043456
    %v206 = vsel %vm205, %v204, 0.0
    %v207 = vrot.slane %v206, 4
    %v208 = vadd.f32 %v206, %v207
    %v209 = vrot.slane %v208, 2
    %v210 = vadd.f32 %v208, %v209
    %v211 = vrot.slane %v210, 1
    %v212 = vadd.f32 %v210, %v211
    %v213 = vadd.f32 %v212, 1e-09
    %v214 = vlog2.pop %v213
    %v215 = vmul.f32 %v214, 0.6931472
    %v216 = vsub.f32 0.0, %v215
    %v217 = vsel %vm57, %v216, 0.0
    %v218 = vld [vmem:[#allocation2] sm:$0x1]
    %219 = vadd.xlane.f32.xlu0 %v217
    %v220 = vpop.xlane.xlu0 %219
    %v221 = vadd.f32 %v218, %v220
    %vm222 = vcmask 0
    %223 = vst.msk [vmem:[#allocation2] sm:$0x1] %vm222, %v221
    // Predicated region
    $region22: #{gmm_loss.3} parent=1 // pred_check
      _
    $region23: #{gmm_loss.3} parent=1 // pred_check_branch
      %225 = sbr.rel (0) target = $region25
    $region24: #{gmm_loss.3} parent=1 // pred_region
      %227 = vsyncadd [#allocation3], 0
      %s229 = sshll.u32 [#allocation2], 4
      %s230 = int_to_ptr.vmem [resolvable:$true] %s229
      %s231 = sshll.u32 %s4, 4
      %s232 = int_to_ptr.hbm [resolvable:$true] %s231
      %234 = dma.vmem_to_hbm [thread:$0]  %s230, 16, %s232, [#allocation3]
    $region25: #{gmm_loss.3} parent=1 // pred_fallthru
      _
    // Predicated region
    $region26: #{gmm_loss.3} parent=1 // pred_check
      _
    $region27: #{gmm_loss.3} parent=1 // pred_check_branch
      %236 = sbr.rel (0) target = $region29
    $region28: #{gmm_loss.3} parent=1 // pred_region
      %238 = dma.done [#allocation3], 16
    $region29: #{gmm_loss.3} parent=1 // pred_fallthru
      _
    %239 = vsyncpa [#allocation3], 1

</llo_original>
